<compile_context>
chip_gen: v5e
topology: v5e:2x2
jax: 0.10.0
libtpu: 0.0.40
codegen_flags: <defaults>
</compile_context>

<pallas_src>
import jax
import jax.numpy as jnp
from jax import lax
from jax.experimental import pallas as pl
from jax.experimental.pallas import tpu as pltpu

# ----------------------------- hyperparameters ------------------------------
NUM_FEATURES = 16
NHID = 32
NUM_LAYERS = 3
TEMPERATURE = 0.2
NUM_GRAPHS = 4
NODES_PER_GRAPH = 8
NUM_NODES = NUM_GRAPHS * NODES_PER_GRAPH
EMBED_DIM = NHID * NUM_LAYERS

VMEM_SPEC = pl.BlockSpec(memory_space=pltpu.MemorySpace.VMEM)
SMEM_SPEC = pl.BlockSpec(memory_space=pltpu.MemorySpace.SMEM)


def _one_hot_rows(num_rows, num_cols, offset):
    """(num_rows, num_cols) f32 selector S with S[r, offset + r] = 1."""
    r = lax.broadcasted_iota(jnp.int32, (num_rows, num_cols), 0)
    c = lax.broadcasted_iota(jnp.int32, (num_rows, num_cols), 1)
    return (c == r + offset).astype(jnp.float32)


# ------------------------------ fused kernel --------------------------------
def _fused_forward_kernel(scalars_ref,
                          x_ref, adj_ref, pool_x_ref, pool_p_ref,
                          gin_w0_ref, gin_w1_ref, gin_w2_ref,
                          gin_b_ref, bn_gamma_ref, bn_beta_ref,
                          gan_w_ref, gan_b_ref,
                          proj_w1_ref, proj_b1_ref, proj_w2_ref, proj_b2_ref,
                          loss_ref):
    adj = adj_ref[...]                         # (N, N)  A[dst, src]
    pool_x = pool_x_ref[...]                   # (2G, N) = [P ; 0]
    pool_p = pool_p_ref[...]                   # (2G, N) = [0 ; P]
    gan_w = gan_w_ref[...]
    gan_b = gan_b_ref[...]
    gan_eps = scalars_ref[NUM_LAYERS]
    inv_temp = 1.0 / scalars_ref[NUM_LAYERS + 1]
    gin_w_refs = (gin_w0_ref, gin_w1_ref, gin_w2_ref)
    inv_n = 1.0 / NUM_NODES

    # (2G, EMBED) slab: rows 0:G -> concat(x_pool), rows G:2G -> concat(xpos_pool)
    slab = jnp.zeros((2 * NUM_GRAPHS, EMBED_DIM), jnp.float32)

    h = x_ref[...]                                               # node features
    agg = jnp.dot(adj, h, preferred_element_type=jnp.float32)    # neighbor sums

    for i in range(NUM_LAYERS):
        eps_i = scalars_ref[i]
        # GINConv(train_eps): Linear((1 + eps) * x + sum_{j in N(v)} x_j)
        pre = jnp.dot((1.0 + eps_i) * h + agg, gin_w_refs[i][...],
                      preferred_element_type=jnp.float32) + gin_b_ref[i:i + 1, :]
        # x = relu(conv(x)); x = bn(x)  (training-mode stats, single pass,
        # scale/shift folded into one multiply-add per element).
        act = jnp.maximum(pre, 0.0)
        mean = jnp.sum(act, axis=0, keepdims=True) * inv_n
        var = jnp.sum(act * act, axis=0, keepdims=True) * inv_n - mean * mean
        scale = bn_gamma_ref[i:i + 1, :] * lax.rsqrt(var + 1e-5)
        shift = bn_beta_ref[i:i + 1, :] - scale * mean
        h = scale * act + shift

        # Neighbor aggregation of h_i, shared by GAN(i) and GIN(i+1).
        agg = jnp.dot(adj, h, preferred_element_type=jnp.float32)

        # TODO(synk): GAN submodule is not defined in the reference source; it
        # is approximated as a shared GIN-style propagation + Linear + ReLU
        # producing the (nhid)-dim positive view the forward requires.
        hp = jnp.dot((1.0 + gan_eps) * h + agg, gan_w,
                     preferred_element_type=jnp.float32) + gan_b
        hp = jnp.maximum(hp, 0.0)

        # global_add_pool of both views in one (2G, NHID) block, then place it
        # at lane columns [i*NHID, (i+1)*NHID) of the slab via one-hot matmul
        # (keeps everything in aligned vreg layouts, no masked stores).
        block = (jnp.dot(pool_x, h, preferred_element_type=jnp.float32)
                 + jnp.dot(pool_p, hp, preferred_element_type=jnp.float32))
        slab = slab + jnp.dot(block, _one_hot_rows(NHID, EMBED_DIM, i * NHID),
                              preferred_element_type=jnp.float32)

    # Shared projection head, batched over [x_pool ; xpos_pool] = (2G, EMBED).
    t = jnp.maximum(jnp.dot(slab, proj_w1_ref[...],
                            preferred_element_type=jnp.float32)
                    + proj_b1_ref[...], 0.0)
    z = jnp.dot(t, proj_w2_ref[...], preferred_element_type=jnp.float32) \
        + proj_b2_ref[...]

    # Row-normalize both views at once (single rsqrt over the (2G, E) slab),
    # then split back into the two views with tiny row-selector matmuls.
    sq = jnp.sum(z * z, axis=1, keepdims=True)
    zn = z * lax.rsqrt(jnp.maximum(sq, 1e-24))        # eps-guard vs zero norm
    sel_x = _one_hot_rows(NUM_GRAPHS, 2 * NUM_GRAPHS, 0)
    sel_p = _one_hot_rows(NUM_GRAPHS, 2 * NUM_GRAPHS, NUM_GRAPHS)
    z1n = jnp.dot(sel_x, zn, preferred_element_type=jnp.float32)  # proj(x_pool)/|.|
    z2n = jnp.dot(sel_p, zn, preferred_element_type=jnp.float32)  # proj(xpos_pool)/|.|

    # NT-Xent loss; exp(sim/T) computed once, both directions from one matrix.
    dn = (((1,), (1,)), ((), ()))                     # 'ik,jk->ij'
    sim = lax.dot_general(z1n, z2n, dn, preferred_element_type=jnp.float32)
    sim = jnp.exp(sim * inv_temp)                     # (G, G)

    g = NUM_GRAPHS
    row = lax.broadcasted_iota(jnp.int32, (g, g), 0)
    col = lax.broadcasted_iota(jnp.int32, (g, g), 1)
    diag = jnp.where(row == col, sim, 0.0)
    pos_r = jnp.sum(diag, axis=1, keepdims=True)      # (g,1) diagonal
    pos_c = jnp.sum(diag, axis=0, keepdims=True)      # (1,g) same diagonal
    row_sum = jnp.sum(sim, axis=1, keepdims=True)     # direction a denominators
    col_sum = jnp.sum(sim, axis=0, keepdims=True)     # direction b (= sim^T rows)
    # -mean(log(pos / (sum - pos))) = -mean(log(pos) - log(sum - pos))
    loss_a = -jnp.sum(jnp.log(pos_r) - jnp.log(row_sum - pos_r)) / g
    loss_b = -jnp.sum(jnp.log(pos_c) - jnp.log(col_sum - pos_c)) / g
    loss_ref[0, 0] = (loss_a + loss_b) * 0.5


# --------------------------------- wrapper -----------------------------------
@jax.jit
def forward(params, x, adj, pool_mat):
    zeros = jnp.zeros_like(pool_mat)
    pool_x_ext = jnp.concatenate([pool_mat, zeros], axis=0)   # (2G, N) = [P ; 0]
    pool_p_ext = jnp.concatenate([zeros, pool_mat], axis=0)   # (2G, N) = [0 ; P]
    scalars = jnp.concatenate([params["gin_eps"], params["gan_eps"],
                               params["temperature"]]).astype(jnp.float32)
    loss = pl.pallas_call(
        _fused_forward_kernel,
        out_shape=jax.ShapeDtypeStruct((1, 1), jnp.float32),
        in_specs=[SMEM_SPEC] + [VMEM_SPEC] * 16,
        out_specs=SMEM_SPEC,
    )(scalars, x, adj, pool_x_ext, pool_p_ext,
      params["gin_w"][0], params["gin_w"][1], params["gin_w"][2],
      params["gin_b"], params["bn_gamma"], params["bn_beta"],
      params["gan_w"], params["gan_b"],
      params["proj_w1"], params["proj_b1"],
      params["proj_w2"], params["proj_b2"])
    return loss[0, 0]


# ------------------------- pure-JAX reference check --------------------------
def forward_reference(params, x, adj, pool_mat):
    xs, xpos = [], []
    h = x
    for i in range(NUM_LAYERS):
        agg = adj @ h
        pre = ((1.0 + params["gin_eps"][i]) * h + agg) @ params["gin_w"][i] \
            + params["gin_b"][i][None, :]
        act = jnp.maximum(pre, 0.0)
        mean = jnp.mean(act, axis=0, keepdims=True)
        var = jnp.mean((act - mean) ** 2, axis=0, keepdims=True)
        h = params["bn_gamma"][i][None, :] * (act - mean) / jnp.sqrt(var + 1e-5) \
            + params["bn_beta"][i][None, :]
        xs.append(h)
        aggp = adj @ h
        hp = jnp.maximum(((1.0 + params["gan_eps"][0]) * h + aggp)
                         @ params["gan_w"] + params["gan_b"], 0.0)
        xpos.append(hp)
    x_pool = jnp.concatenate([pool_mat @ t for t in xs], axis=1)
    p_pool = jnp.concatenate([pool_mat @ t for t in xpos], axis=1)

    def proj(v):
        t = jnp.maximum(v @ params["proj_w1"] + params["proj_b1"], 0.0)
        return t @ params["proj_w2"] + params["proj_b2"]

    z1, z2 = proj(x_pool), proj(p_pool)

    def nt_xent(a, b):
        an = jnp.linalg.norm(a, axis=1)
        bn = jnp.linalg.norm(b, axis=1)
        sim = jnp.exp((a @ b.T) / (an[:, None] * bn[None, :]) / TEMPERATURE)
        pos = jnp.diag(sim)
        return -jnp.mean(jnp.log(pos / (sim.sum(axis=1) - pos)))

    return 0.5 * (nt_xent(z1, z2) + nt_xent(z2, z1))


# ----------------------------------- main ------------------------------------
if __name__ == "__main__":
    key = jax.random.PRNGKey(0)
    keys = jax.random.split(key, 8)

    # Node features: [num_nodes, num_features]
    x = jax.random.normal(keys[0], (NUM_NODES, NUM_FEATURES), jnp.float32)

    # Graph structure: ring graphs, bidirectional edges.
    srcs, dsts = [], []
    local = jnp.arange(NODES_PER_GRAPH)
    nxt = (local + 1) % NODES_PER_GRAPH
    for g in range(NUM_GRAPHS):
        off = g * NODES_PER_GRAPH
        srcs += [local + off, nxt + off]
        dsts += [nxt + off, local + off]
    src = jnp.concatenate(srcs)
    dst = jnp.concatenate(dsts)
    batch = jnp.repeat(jnp.arange(NUM_GRAPHS), NODES_PER_GRAPH)

    # Densified structure: A[dst, src] (GIN sum aggregation) and one-hot
    # pooling P[graph, node] (global_add_pool).
    adj = jnp.zeros((NUM_NODES, NUM_NODES), jnp.float32).at[dst, src].add(1.0)
    pool_mat = (batch[None, :] == jnp.arange(NUM_GRAPHS)[:, None]).astype(jnp.float32)

    def lin(k, fan_in, fan_out):
        return 0.1 * jax.random.normal(k, (fan_in, fan_out), jnp.float32)

    params = dict(
        gin_w=[lin(keys[1], NUM_FEATURES, NHID),
               lin(keys[2], NHID, NHID),
               lin(keys[3], NHID, NHID)],
        gin_b=jnp.zeros((NUM_LAYERS, NHID), jnp.float32),
        gin_eps=jnp.zeros((NUM_LAYERS,), jnp.float32),        # train_eps init 0
        bn_gamma=jnp.ones((NUM_LAYERS, NHID), jnp.float32),
        bn_beta=jnp.zeros((NUM_LAYERS, NHID), jnp.float32),
        gan_w=lin(keys[4], NHID, NHID),
        gan_b=jnp.zeros((1, NHID), jnp.float32),
        gan_eps=jnp.zeros((1,), jnp.float32),
        proj_w1=lin(keys[5], EMBED_DIM, EMBED_DIM),
        proj_b1=jnp.zeros((1, EMBED_DIM), jnp.float32),
        proj_w2=lin(keys[6], EMBED_DIM, EMBED_DIM),
        proj_b2=jnp.zeros((1, EMBED_DIM), jnp.float32),
        temperature=jnp.full((1,), TEMPERATURE, jnp.float32),
    )

    loss = forward(params, x, adj, pool_mat)
    loss = jax.block_until_ready(loss)
    ref = forward_reference(params, x, adj, pool_mat)

    assert jnp.isfinite(loss), f"non-finite loss: {loss}"
    assert abs(float(loss) - float(ref)) < 1e-3 + 1e-3 * abs(float(ref)), (
        f"kernel loss {float(loss)} != reference {float(ref)}")
    print("KERNEL_OK")
</pallas_src>

<mosaic_0001>
module attributes {stable_mosaic.version = 11 : i64} {
  func.func @_fused_forward_kernel(%arg0: memref<5xf32, #tpu.memory_space<smem>>, %arg1: memref<32x16xf32, #tpu.memory_space<vmem>>, %arg2: memref<32x32xf32, #tpu.memory_space<vmem>>, %arg3: memref<8x32xf32, #tpu.memory_space<vmem>>, %arg4: memref<8x32xf32, #tpu.memory_space<vmem>>, %arg5: memref<16x32xf32, #tpu.memory_space<vmem>>, %arg6: memref<32x32xf32, #tpu.memory_space<vmem>>, %arg7: memref<32x32xf32, #tpu.memory_space<vmem>>, %arg8: memref<3x32xf32, #tpu.memory_space<vmem>>, %arg9: memref<3x32xf32, #tpu.memory_space<vmem>>, %arg10: memref<3x32xf32, #tpu.memory_space<vmem>>, %arg11: memref<32x32xf32, #tpu.memory_space<vmem>>, %arg12: memref<1x32xf32, #tpu.memory_space<vmem>>, %arg13: memref<96x96xf32, #tpu.memory_space<vmem>>, %arg14: memref<1x96xf32, #tpu.memory_space<vmem>>, %arg15: memref<96x96xf32, #tpu.memory_space<vmem>>, %arg16: memref<1x96xf32, #tpu.memory_space<vmem>>, %arg17: memref<1x1xf32, #tpu.memory_space<smem>>) attributes {dimension_semantics = [], scalar_prefetch = 0 : i64, scratch_operands = 0 : i64, tpu.core_type = #tpu.core_type<tc>} {
    %c0 = arith.constant 0 : index
    %c0_0 = arith.constant 0 : index
    %0 = vector.load %arg2[%c0, %c0_0] : memref<32x32xf32, #tpu.memory_space<vmem>>, vector<32x32xf32>
    %c0_1 = arith.constant 0 : index
    %c0_2 = arith.constant 0 : index
    %1 = vector.load %arg3[%c0_1, %c0_2] : memref<8x32xf32, #tpu.memory_space<vmem>>, vector<8x32xf32>
    %c0_3 = arith.constant 0 : index
    %c0_4 = arith.constant 0 : index
    %2 = vector.load %arg4[%c0_3, %c0_4] : memref<8x32xf32, #tpu.memory_space<vmem>>, vector<8x32xf32>
    %c0_5 = arith.constant 0 : index
    %c0_6 = arith.constant 0 : index
    %3 = vector.load %arg11[%c0_5, %c0_6] : memref<32x32xf32, #tpu.memory_space<vmem>>, vector<32x32xf32>
    %c0_7 = arith.constant 0 : index
    %c0_8 = arith.constant 0 : index
    %4 = vector.load %arg12[%c0_7, %c0_8] : memref<1x32xf32, #tpu.memory_space<vmem>>, vector<1x32xf32>
    %c3 = arith.constant 3 : index
    %5 = memref.load %arg0[%c3] : memref<5xf32, #tpu.memory_space<smem>>
    %c4 = arith.constant 4 : index
    %6 = memref.load %arg0[%c4] : memref<5xf32, #tpu.memory_space<smem>>
    %cst = arith.constant 1.000000e+00 : f32
    %7 = arith.divf %cst, %6 : f32
    %cst_9 = arith.constant 0.000000e+00 : f32
    %8 = vector.broadcast %cst_9 : f32 to vector<8x96xf32>
    %c0_10 = arith.constant 0 : index
    %c0_11 = arith.constant 0 : index
    %9 = vector.load %arg1[%c0_10, %c0_11] : memref<32x16xf32, #tpu.memory_space<vmem>>, vector<32x16xf32>
    %cst_12 = arith.constant dense<0.000000e+00> : vector<32x16xf32>
    %10 = tpu.matmul %0, %9, %cst_12 {dimension_numbers = #tpu.dot_dimension_numbers<[1], [0], [0], [1], [0, 0, 1, 1], [], []>} : vector<32x32xf32>, vector<32x16xf32>, vector<32x16xf32> -> vector<32x16xf32>
    %c0_13 = arith.constant 0 : index
    %11 = memref.load %arg0[%c0_13] : memref<5xf32, #tpu.memory_space<smem>>
    %cst_14 = arith.constant 1.000000e+00 : f32
    %12 = arith.addf %cst_14, %11 : f32
    %13 = vector.broadcast %12 : f32 to vector<32x16xf32>
    %14 = arith.mulf %13, %9 : vector<32x16xf32>
    %15 = arith.addf %14, %10 : vector<32x16xf32>
    %c0_15 = arith.constant 0 : index
    %c0_16 = arith.constant 0 : index
    %16 = vector.load %arg5[%c0_15, %c0_16] : memref<16x32xf32, #tpu.memory_space<vmem>>, vector<16x32xf32>
    %cst_17 = arith.constant dense<0.000000e+00> : vector<32x32xf32>
    %17 = tpu.matmul %15, %16, %cst_17 {dimension_numbers = #tpu.dot_dimension_numbers<[1], [0], [0], [1], [0, 0, 1, 1], [], []>} : vector<32x16xf32>, vector<16x32xf32>, vector<32x32xf32> -> vector<32x32xf32>
    %c0_18 = arith.constant 0 : index
    %c0_19 = arith.constant 0 : index
    %18 = vector.load %arg8[%c0_18, %c0_19] : memref<3x32xf32, #tpu.memory_space<vmem>>, vector<1x32xf32>
    %19 = vector.broadcast %18 : vector<1x32xf32> to vector<32x32xf32>
    %20 = arith.addf %17, %19 : vector<32x32xf32>
    %cst_20 = arith.constant 0.000000e+00 : f32
    %21 = vector.broadcast %cst_20 : f32 to vector<32x32xf32>
    %22 = arith.maximumf %20, %21 : vector<32x32xf32>
    %cst_21 = arith.constant dense<0.000000e+00> : vector<32xf32>
    %23 = vector.multi_reduction <add>, %22, %cst_21 [0] : vector<32x32xf32> to vector<32xf32>
    %24 = vector.shape_cast %23 : vector<32xf32> to vector<1x32xf32>
    %cst_22 = arith.constant 3.125000e-02 : f32
    %25 = vector.broadcast %cst_22 : f32 to vector<1x32xf32>
    %26 = arith.mulf %24, %25 : vector<1x32xf32>
    %27 = arith.mulf %22, %22 : vector<32x32xf32>
    %cst_23 = arith.constant dense<0.000000e+00> : vector<32xf32>
    %28 = vector.multi_reduction <add>, %27, %cst_23 [0] : vector<32x32xf32> to vector<32xf32>
    %29 = vector.shape_cast %28 : vector<32xf32> to vector<1x32xf32>
    %cst_24 = arith.constant 3.125000e-02 : f32
    %30 = vector.broadcast %cst_24 : f32 to vector<1x32xf32>
    %31 = arith.mulf %29, %30 : vector<1x32xf32>
    %32 = arith.mulf %26, %26 : vector<1x32xf32>
    %33 = arith.subf %31, %32 : vector<1x32xf32>
    %c0_25 = arith.constant 0 : index
    %c0_26 = arith.constant 0 : index
    %34 = vector.load %arg9[%c0_25, %c0_26] : memref<3x32xf32, #tpu.memory_space<vmem>>, vector<1x32xf32>
    %cst_27 = arith.constant 9.99999974E-6 : f32
    %35 = vector.broadcast %cst_27 : f32 to vector<1x32xf32>
    %36 = arith.addf %33, %35 : vector<1x32xf32>
    %37 = math.rsqrt %36 : vector<1x32xf32>
    %38 = arith.mulf %34, %37 : vector<1x32xf32>
    %c0_28 = arith.constant 0 : index
    %c0_29 = arith.constant 0 : index
    %39 = vector.load %arg10[%c0_28, %c0_29] : memref<3x32xf32, #tpu.memory_space<vmem>>, vector<1x32xf32>
    %40 = arith.mulf %38, %26 : vector<1x32xf32>
    %41 = arith.subf %39, %40 : vector<1x32xf32>
    %42 = vector.broadcast %38 : vector<1x32xf32> to vector<32x32xf32>
    %43 = arith.mulf %42, %22 : vector<32x32xf32>
    %44 = vector.broadcast %41 : vector<1x32xf32> to vector<32x32xf32>
    %45 = arith.addf %43, %44 : vector<32x32xf32>
    %cst_30 = arith.constant dense<0.000000e+00> : vector<32x32xf32>
    %46 = tpu.matmul %0, %45, %cst_30 {dimension_numbers = #tpu.dot_dimension_numbers<[1], [0], [0], [1], [0, 0, 1, 1], [], []>} : vector<32x32xf32>, vector<32x32xf32>, vector<32x32xf32> -> vector<32x32xf32>
    %cst_31 = arith.constant 1.000000e+00 : f32
    %47 = arith.addf %cst_31, %5 : f32
    %48 = vector.broadcast %47 : f32 to vector<32x32xf32>
    %49 = arith.mulf %48, %45 : vector<32x32xf32>
    %50 = arith.addf %49, %46 : vector<32x32xf32>
    %cst_32 = arith.constant dense<0.000000e+00> : vector<32x32xf32>
    %51 = tpu.matmul %50, %3, %cst_32 {dimension_numbers = #tpu.dot_dimension_numbers<[1], [0], [0], [1], [0, 0, 1, 1], [], []>} : vector<32x32xf32>, vector<32x32xf32>, vector<32x32xf32> -> vector<32x32xf32>
    %52 = vector.broadcast %4 : vector<1x32xf32> to vector<32x32xf32>
    %53 = arith.addf %51, %52 : vector<32x32xf32>
    %cst_33 = arith.constant 0.000000e+00 : f32
    %54 = vector.broadcast %cst_33 : f32 to vector<32x32xf32>
    %55 = arith.maximumf %53, %54 : vector<32x32xf32>
    %cst_34 = arith.constant dense<0.000000e+00> : vector<8x32xf32>
    %56 = tpu.matmul %1, %45, %cst_34 {dimension_numbers = #tpu.dot_dimension_numbers<[1], [0], [0], [1], [0, 0, 1, 1], [], []>} : vector<8x32xf32>, vector<32x32xf32>, vector<8x32xf32> -> vector<8x32xf32>
    %cst_35 = arith.constant dense<0.000000e+00> : vector<8x32xf32>
    %57 = tpu.matmul %2, %55, %cst_35 {dimension_numbers = #tpu.dot_dimension_numbers<[1], [0], [0], [1], [0, 0, 1, 1], [], []>} : vector<8x32xf32>, vector<32x32xf32>, vector<8x32xf32> -> vector<8x32xf32>
    %58 = arith.addf %56, %57 : vector<8x32xf32>
    %59 = tpu.iota {dimensions = array<i32: 0>} : vector<32x96xi32>
    %60 = tpu.iota {dimensions = array<i32: 1>} : vector<32x96xi32>
    %c0_i32 = arith.constant 0 : i32
    %61 = vector.broadcast %c0_i32 : i32 to vector<32x96xi32>
    %62 = arith.addi %59, %61 : vector<32x96xi32>
    %63 = arith.cmpi eq, %60, %62 : vector<32x96xi32>
    %64 = arith.extui %63 : vector<32x96xi1> to vector<32x96xi32>
    %65 = arith.sitofp %64 : vector<32x96xi32> to vector<32x96xf32>
    %cst_36 = arith.constant dense<0.000000e+00> : vector<8x96xf32>
    %66 = tpu.matmul %58, %65, %cst_36 {dimension_numbers = #tpu.dot_dimension_numbers<[1], [0], [0], [1], [0, 0, 1, 1], [], []>} : vector<8x32xf32>, vector<32x96xf32>, vector<8x96xf32> -> vector<8x96xf32>
    %67 = arith.addf %8, %66 : vector<8x96xf32>
    %c1 = arith.constant 1 : index
    %68 = memref.load %arg0[%c1] : memref<5xf32, #tpu.memory_space<smem>>
    %cst_37 = arith.constant 1.000000e+00 : f32
    %69 = arith.addf %cst_37, %68 : f32
    %70 = vector.broadcast %69 : f32 to vector<32x32xf32>
    %71 = arith.mulf %70, %45 : vector<32x32xf32>
    %72 = arith.addf %71, %46 : vector<32x32xf32>
    %c0_38 = arith.constant 0 : index
    %c0_39 = arith.constant 0 : index
    %73 = vector.load %arg6[%c0_38, %c0_39] : memref<32x32xf32, #tpu.memory_space<vmem>>, vector<32x32xf32>
    %cst_40 = arith.constant dense<0.000000e+00> : vector<32x32xf32>
    %74 = tpu.matmul %72, %73, %cst_40 {dimension_numbers = #tpu.dot_dimension_numbers<[1], [0], [0], [1], [0, 0, 1, 1], [], []>} : vector<32x32xf32>, vector<32x32xf32>, vector<32x32xf32> -> vector<32x32xf32>
    %c1_41 = arith.constant 1 : index
    %c0_42 = arith.constant 0 : index
    %75 = vector.load %arg8[%c1_41, %c0_42] : memref<3x32xf32, #tpu.memory_space<vmem>>, vector<1x32xf32>
    %76 = vector.broadcast %75 : vector<1x32xf32> to vector<32x32xf32>
    %77 = arith.addf %74, %76 : vector<32x32xf32>
    %cst_43 = arith.constant 0.000000e+00 : f32
    %78 = vector.broadcast %cst_43 : f32 to vector<32x32xf32>
    %79 = arith.maximumf %77, %78 : vector<32x32xf32>
    %cst_44 = arith.constant dense<0.000000e+00> : vector<32xf32>
    %80 = vector.multi_reduction <add>, %79, %cst_44 [0] : vector<32x32xf32> to vector<32xf32>
    %81 = vector.shape_cast %80 : vector<32xf32> to vector<1x32xf32>
    %cst_45 = arith.constant 3.125000e-02 : f32
    %82 = vector.broadcast %cst_45 : f32 to vector<1x32xf32>
    %83 = arith.mulf %81, %82 : vector<1x32xf32>
    %84 = arith.mulf %79, %79 : vector<32x32xf32>
    %cst_46 = arith.constant dense<0.000000e+00> : vector<32xf32>
    %85 = vector.multi_reduction <add>, %84, %cst_46 [0] : vector<32x32xf32> to vector<32xf32>
    %86 = vector.shape_cast %85 : vector<32xf32> to vector<1x32xf32>
    %cst_47 = arith.constant 3.125000e-02 : f32
    %87 = vector.broadcast %cst_47 : f32 to vector<1x32xf32>
    %88 = arith.mulf %86, %87 : vector<1x32xf32>
    %89 = arith.mulf %83, %83 : vector<1x32xf32>
    %90 = arith.subf %88, %89 : vector<1x32xf32>
    %c1_48 = arith.constant 1 : index
    %c0_49 = arith.constant 0 : index
    %91 = vector.load %arg9[%c1_48, %c0_49] : memref<3x32xf32, #tpu.memory_space<vmem>>, vector<1x32xf32>
    %cst_50 = arith.constant 9.99999974E-6 : f32
    %92 = vector.broadcast %cst_50 : f32 to vector<1x32xf32>
    %93 = arith.addf %90, %92 : vector<1x32xf32>
    %94 = math.rsqrt %93 : vector<1x32xf32>
    %95 = arith.mulf %91, %94 : vector<1x32xf32>
    %c1_51 = arith.constant 1 : index
    %c0_52 = arith.constant 0 : index
    %96 = vector.load %arg10[%c1_51, %c0_52] : memref<3x32xf32, #tpu.memory_space<vmem>>, vector<1x32xf32>
    %97 = arith.mulf %95, %83 : vector<1x32xf32>
    %98 = arith.subf %96, %97 : vector<1x32xf32>
    %99 = vector.broadcast %95 : vector<1x32xf32> to vector<32x32xf32>
    %100 = arith.mulf %99, %79 : vector<32x32xf32>
    %101 = vector.broadcast %98 : vector<1x32xf32> to vector<32x32xf32>
    %102 = arith.addf %100, %101 : vector<32x32xf32>
    %cst_53 = arith.constant dense<0.000000e+00> : vector<32x32xf32>
    %103 = tpu.matmul %0, %102, %cst_53 {dimension_numbers = #tpu.dot_dimension_numbers<[1], [0], [0], [1], [0, 0, 1, 1], [], []>} : vector<32x32xf32>, vector<32x32xf32>, vector<32x32xf32> -> vector<32x32xf32>
    %cst_54 = arith.constant 1.000000e+00 : f32
    %104 = arith.addf %cst_54, %5 : f32
    %105 = vector.broadcast %104 : f32 to vector<32x32xf32>
    %106 = arith.mulf %105, %102 : vector<32x32xf32>
    %107 = arith.addf %106, %103 : vector<32x32xf32>
    %cst_55 = arith.constant dense<0.000000e+00> : vector<32x32xf32>
    %108 = tpu.matmul %107, %3, %cst_55 {dimension_numbers = #tpu.dot_dimension_numbers<[1], [0], [0], [1], [0, 0, 1, 1], [], []>} : vector<32x32xf32>, vector<32x32xf32>, vector<32x32xf32> -> vector<32x32xf32>
    %109 = vector.broadcast %4 : vector<1x32xf32> to vector<32x32xf32>
    %110 = arith.addf %108, %109 : vector<32x32xf32>
    %cst_56 = arith.constant 0.000000e+00 : f32
    %111 = vector.broadcast %cst_56 : f32 to vector<32x32xf32>
    %112 = arith.maximumf %110, %111 : vector<32x32xf32>
    %cst_57 = arith.constant dense<0.000000e+00> : vector<8x32xf32>
    %113 = tpu.matmul %1, %102, %cst_57 {dimension_numbers = #tpu.dot_dimension_numbers<[1], [0], [0], [1], [0, 0, 1, 1], [], []>} : vector<8x32xf32>, vector<32x32xf32>, vector<8x32xf32> -> vector<8x32xf32>
    %cst_58 = arith.constant dense<0.000000e+00> : vector<8x32xf32>
    %114 = tpu.matmul %2, %112, %cst_58 {dimension_numbers = #tpu.dot_dimension_numbers<[1], [0], [0], [1], [0, 0, 1, 1], [], []>} : vector<8x32xf32>, vector<32x32xf32>, vector<8x32xf32> -> vector<8x32xf32>
    %115 = arith.addf %113, %114 : vector<8x32xf32>
    %116 = tpu.iota {dimensions = array<i32: 0>} : vector<32x96xi32>
    %117 = tpu.iota {dimensions = array<i32: 1>} : vector<32x96xi32>
    %c32_i32 = arith.constant 32 : i32
    %118 = vector.broadcast %c32_i32 : i32 to vector<32x96xi32>
    %119 = arith.addi %116, %118 : vector<32x96xi32>
    %120 = arith.cmpi eq, %117, %119 : vector<32x96xi32>
    %121 = arith.extui %120 : vector<32x96xi1> to vector<32x96xi32>
    %122 = arith.sitofp %121 : vector<32x96xi32> to vector<32x96xf32>
    %cst_59 = arith.constant dense<0.000000e+00> : vector<8x96xf32>
    %123 = tpu.matmul %115, %122, %cst_59 {dimension_numbers = #tpu.dot_dimension_numbers<[1], [0], [0], [1], [0, 0, 1, 1], [], []>} : vector<8x32xf32>, vector<32x96xf32>, vector<8x96xf32> -> vector<8x96xf32>
    %124 = arith.addf %67, %123 : vector<8x96xf32>
    %c2 = arith.constant 2 : index
    %125 = memref.load %arg0[%c2] : memref<5xf32, #tpu.memory_space<smem>>
    %cst_60 = arith.constant 1.000000e+00 : f32
    %126 = arith.addf %cst_60, %125 : f32
    %127 = vector.broadcast %126 : f32 to vector<32x32xf32>
    %128 = arith.mulf %127, %102 : vector<32x32xf32>
    %129 = arith.addf %128, %103 : vector<32x32xf32>
    %c0_61 = arith.constant 0 : index
    %c0_62 = arith.constant 0 : index
    %130 = vector.load %arg7[%c0_61, %c0_62] : memref<32x32xf32, #tpu.memory_space<vmem>>, vector<32x32xf32>
    %cst_63 = arith.constant dense<0.000000e+00> : vector<32x32xf32>
    %131 = tpu.matmul %129, %130, %cst_63 {dimension_numbers = #tpu.dot_dimension_numbers<[1], [0], [0], [1], [0, 0, 1, 1], [], []>} : vector<32x32xf32>, vector<32x32xf32>, vector<32x32xf32> -> vector<32x32xf32>
    %c2_64 = arith.constant 2 : index
    %c0_65 = arith.constant 0 : index
    %132 = vector.load %arg8[%c2_64, %c0_65] : memref<3x32xf32, #tpu.memory_space<vmem>>, vector<1x32xf32>
    %133 = vector.broadcast %132 : vector<1x32xf32> to vector<32x32xf32>
    %134 = arith.addf %131, %133 : vector<32x32xf32>
    %cst_66 = arith.constant 0.000000e+00 : f32
    %135 = vector.broadcast %cst_66 : f32 to vector<32x32xf32>
    %136 = arith.maximumf %134, %135 : vector<32x32xf32>
    %cst_67 = arith.constant dense<0.000000e+00> : vector<32xf32>
    %137 = vector.multi_reduction <add>, %136, %cst_67 [0] : vector<32x32xf32> to vector<32xf32>
    %138 = vector.shape_cast %137 : vector<32xf32> to vector<1x32xf32>
    %cst_68 = arith.constant 3.125000e-02 : f32
    %139 = vector.broadcast %cst_68 : f32 to vector<1x32xf32>
    %140 = arith.mulf %138, %139 : vector<1x32xf32>
    %141 = arith.mulf %136, %136 : vector<32x32xf32>
    %cst_69 = arith.constant dense<0.000000e+00> : vector<32xf32>
    %142 = vector.multi_reduction <add>, %141, %cst_69 [0] : vector<32x32xf32> to vector<32xf32>
    %143 = vector.shape_cast %142 : vector<32xf32> to vector<1x32xf32>
    %cst_70 = arith.constant 3.125000e-02 : f32
    %144 = vector.broadcast %cst_70 : f32 to vector<1x32xf32>
    %145 = arith.mulf %143, %144 : vector<1x32xf32>
    %146 = arith.mulf %140, %140 : vector<1x32xf32>
    %147 = arith.subf %145, %146 : vector<1x32xf32>
    %c2_71 = arith.constant 2 : index
    %c0_72 = arith.constant 0 : index
    %148 = vector.load %arg9[%c2_71, %c0_72] : memref<3x32xf32, #tpu.memory_space<vmem>>, vector<1x32xf32>
    %cst_73 = arith.constant 9.99999974E-6 : f32
    %149 = vector.broadcast %cst_73 : f32 to vector<1x32xf32>
    %150 = arith.addf %147, %149 : vector<1x32xf32>
    %151 = math.rsqrt %150 : vector<1x32xf32>
    %152 = arith.mulf %148, %151 : vector<1x32xf32>
    %c2_74 = arith.constant 2 : index
    %c0_75 = arith.constant 0 : index
    %153 = vector.load %arg10[%c2_74, %c0_75] : memref<3x32xf32, #tpu.memory_space<vmem>>, vector<1x32xf32>
    %154 = arith.mulf %152, %140 : vector<1x32xf32>
    %155 = arith.subf %153, %154 : vector<1x32xf32>
    %156 = vector.broadcast %152 : vector<1x32xf32> to vector<32x32xf32>
    %157 = arith.mulf %156, %136 : vector<32x32xf32>
    %158 = vector.broadcast %155 : vector<1x32xf32> to vector<32x32xf32>
    %159 = arith.addf %157, %158 : vector<32x32xf32>
    %cst_76 = arith.constant dense<0.000000e+00> : vector<32x32xf32>
    %160 = tpu.matmul %0, %159, %cst_76 {dimension_numbers = #tpu.dot_dimension_numbers<[1], [0], [0], [1], [0, 0, 1, 1], [], []>} : vector<32x32xf32>, vector<32x32xf32>, vector<32x32xf32> -> vector<32x32xf32>
    %cst_77 = arith.constant 1.000000e+00 : f32
    %161 = arith.addf %cst_77, %5 : f32
    %162 = vector.broadcast %161 : f32 to vector<32x32xf32>
    %163 = arith.mulf %162, %159 : vector<32x32xf32>
    %164 = arith.addf %163, %160 : vector<32x32xf32>
    %cst_78 = arith.constant dense<0.000000e+00> : vector<32x32xf32>
    %165 = tpu.matmul %164, %3, %cst_78 {dimension_numbers = #tpu.dot_dimension_numbers<[1], [0], [0], [1], [0, 0, 1, 1], [], []>} : vector<32x32xf32>, vector<32x32xf32>, vector<32x32xf32> -> vector<32x32xf32>
    %166 = vector.broadcast %4 : vector<1x32xf32> to vector<32x32xf32>
    %167 = arith.addf %165, %166 : vector<32x32xf32>
    %cst_79 = arith.constant 0.000000e+00 : f32
    %168 = vector.broadcast %cst_79 : f32 to vector<32x32xf32>
    %169 = arith.maximumf %167, %168 : vector<32x32xf32>
    %cst_80 = arith.constant dense<0.000000e+00> : vector<8x32xf32>
    %170 = tpu.matmul %1, %159, %cst_80 {dimension_numbers = #tpu.dot_dimension_numbers<[1], [0], [0], [1], [0, 0, 1, 1], [], []>} : vector<8x32xf32>, vector<32x32xf32>, vector<8x32xf32> -> vector<8x32xf32>
    %cst_81 = arith.constant dense<0.000000e+00> : vector<8x32xf32>
    %171 = tpu.matmul %2, %169, %cst_81 {dimension_numbers = #tpu.dot_dimension_numbers<[1], [0], [0], [1], [0, 0, 1, 1], [], []>} : vector<8x32xf32>, vector<32x32xf32>, vector<8x32xf32> -> vector<8x32xf32>
    %172 = arith.addf %170, %171 : vector<8x32xf32>
    %173 = tpu.iota {dimensions = array<i32: 0>} : vector<32x96xi32>
    %174 = tpu.iota {dimensions = array<i32: 1>} : vector<32x96xi32>
    %c64_i32 = arith.constant 64 : i32
    %175 = vector.broadcast %c64_i32 : i32 to vector<32x96xi32>
    %176 = arith.addi %173, %175 : vector<32x96xi32>
    %177 = arith.cmpi eq, %174, %176 : vector<32x96xi32>
    %178 = arith.extui %177 : vector<32x96xi1> to vector<32x96xi32>
    %179 = arith.sitofp %178 : vector<32x96xi32> to vector<32x96xf32>
    %cst_82 = arith.constant dense<0.000000e+00> : vector<8x96xf32>
    %180 = tpu.matmul %172, %179, %cst_82 {dimension_numbers = #tpu.dot_dimension_numbers<[1], [0], [0], [1], [0, 0, 1, 1], [], []>} : vector<8x32xf32>, vector<32x96xf32>, vector<8x96xf32> -> vector<8x96xf32>
    %181 = arith.addf %124, %180 : vector<8x96xf32>
    %c0_83 = arith.constant 0 : index
    %c0_84 = arith.constant 0 : index
    %182 = vector.load %arg13[%c0_83, %c0_84] : memref<96x96xf32, #tpu.memory_space<vmem>>, vector<96x96xf32>
    %cst_85 = arith.constant dense<0.000000e+00> : vector<8x96xf32>
    %183 = tpu.matmul %181, %182, %cst_85 {dimension_numbers = #tpu.dot_dimension_numbers<[1], [0], [0], [1], [0, 0, 1, 1], [], []>} : vector<8x96xf32>, vector<96x96xf32>, vector<8x96xf32> -> vector<8x96xf32>
    %c0_86 = arith.constant 0 : index
    %c0_87 = arith.constant 0 : index
    %184 = vector.load %arg14[%c0_86, %c0_87] : memref<1x96xf32, #tpu.memory_space<vmem>>, vector<1x96xf32>
    %185 = vector.broadcast %184 : vector<1x96xf32> to vector<8x96xf32>
    %186 = arith.addf %183, %185 : vector<8x96xf32>
    %cst_88 = arith.constant 0.000000e+00 : f32
    %187 = vector.broadcast %cst_88 : f32 to vector<8x96xf32>
    %188 = arith.maximumf %186, %187 : vector<8x96xf32>
    %c0_89 = arith.constant 0 : index
    %c0_90 = arith.constant 0 : index
    %189 = vector.load %arg15[%c0_89, %c0_90] : memref<96x96xf32, #tpu.memory_space<vmem>>, vector<96x96xf32>
    %cst_91 = arith.constant dense<0.000000e+00> : vector<8x96xf32>
    %190 = tpu.matmul %188, %189, %cst_91 {dimension_numbers = #tpu.dot_dimension_numbers<[1], [0], [0], [1], [0, 0, 1, 1], [], []>} : vector<8x96xf32>, vector<96x96xf32>, vector<8x96xf32> -> vector<8x96xf32>
    %c0_92 = arith.constant 0 : index
    %c0_93 = arith.constant 0 : index
    %191 = vector.load %arg16[%c0_92, %c0_93] : memref<1x96xf32, #tpu.memory_space<vmem>>, vector<1x96xf32>
    %192 = vector.broadcast %191 : vector<1x96xf32> to vector<8x96xf32>
    %193 = arith.addf %190, %192 : vector<8x96xf32>
    %194 = arith.mulf %193, %193 : vector<8x96xf32>
    %cst_94 = arith.constant dense<0.000000e+00> : vector<8xf32>
    %195 = vector.multi_reduction <add>, %194, %cst_94 [1] : vector<8x96xf32> to vector<8xf32>
    %196 = vector.shape_cast %195 : vector<8xf32> to vector<8x1xf32>
    %cst_95 = arith.constant 1.000000e-24 : f32
    %197 = vector.broadcast %cst_95 : f32 to vector<8x1xf32>
    %198 = arith.maximumf %196, %197 : vector<8x1xf32>
    %199 = math.rsqrt %198 : vector<8x1xf32>
    %200 = vector.broadcast %199 : vector<8x1xf32> to vector<8x96xf32>
    %201 = arith.mulf %193, %200 : vector<8x96xf32>
    %202 = tpu.iota {dimensions = array<i32: 0>} : vector<4x8xi32>
    %203 = tpu.iota {dimensions = array<i32: 1>} : vector<4x8xi32>
    %c0_i32_96 = arith.constant 0 : i32
    %204 = vector.broadcast %c0_i32_96 : i32 to vector<4x8xi32>
    %205 = arith.addi %202, %204 : vector<4x8xi32>
    %206 = arith.cmpi eq, %203, %205 : vector<4x8xi32>
    %207 = arith.extui %206 : vector<4x8xi1> to vector<4x8xi32>
    %208 = arith.sitofp %207 : vector<4x8xi32> to vector<4x8xf32>
    %209 = tpu.iota {dimensions = array<i32: 0>} : vector<4x8xi32>
    %210 = tpu.iota {dimensions = array<i32: 1>} : vector<4x8xi32>
    %c4_i32 = arith.constant 4 : i32
    %211 = vector.broadcast %c4_i32 : i32 to vector<4x8xi32>
    %212 = arith.addi %209, %211 : vector<4x8xi32>
    %213 = arith.cmpi eq, %210, %212 : vector<4x8xi32>
    %214 = arith.extui %213 : vector<4x8xi1> to vector<4x8xi32>
    %215 = arith.sitofp %214 : vector<4x8xi32> to vector<4x8xf32>
    %cst_97 = arith.constant dense<0.000000e+00> : vector<4x96xf32>
    %216 = tpu.matmul %208, %201, %cst_97 {dimension_numbers = #tpu.dot_dimension_numbers<[1], [0], [0], [1], [0, 0, 1, 1], [], []>} : vector<4x8xf32>, vector<8x96xf32>, vector<4x96xf32> -> vector<4x96xf32>
    %cst_98 = arith.constant dense<0.000000e+00> : vector<4x96xf32>
    %217 = tpu.matmul %215, %201, %cst_98 {dimension_numbers = #tpu.dot_dimension_numbers<[1], [0], [0], [1], [0, 0, 1, 1], [], []>} : vector<4x8xf32>, vector<8x96xf32>, vector<4x96xf32> -> vector<4x96xf32>
    %cst_99 = arith.constant dense<0.000000e+00> : vector<4x4xf32>
    %218 = tpu.matmul %216, %217, %cst_99 {dimension_numbers = #tpu.dot_dimension_numbers<[1], [1], [0], [0], [0, 0, 1, 0], [], []>} : vector<4x96xf32>, vector<4x96xf32>, vector<4x4xf32> -> vector<4x4xf32>
    %219 = vector.broadcast %7 : f32 to vector<4x4xf32>
    %220 = arith.mulf %218, %219 : vector<4x4xf32>
    %221 = math.exp %220 : vector<4x4xf32>
    %222 = tpu.iota {dimensions = array<i32: 0>} : vector<4x4xi32>
    %223 = tpu.iota {dimensions = array<i32: 1>} : vector<4x4xi32>
    %224 = arith.cmpi eq, %222, %223 : vector<4x4xi32>
    %cst_100 = arith.constant 0.000000e+00 : f32
    %225 = vector.broadcast %cst_100 : f32 to vector<4x4xf32>
    %226 = arith.select %224, %221, %225 : vector<4x4xi1>, vector<4x4xf32>
    %cst_101 = arith.constant dense<0.000000e+00> : vector<4xf32>
    %227 = vector.multi_reduction <add>, %226, %cst_101 [1] : vector<4x4xf32> to vector<4xf32>
    %228 = vector.shape_cast %227 : vector<4xf32> to vector<4x1xf32>
    %cst_102 = arith.constant dense<0.000000e+00> : vector<4xf32>
    %229 = vector.multi_reduction <add>, %226, %cst_102 [0] : vector<4x4xf32> to vector<4xf32>
    %230 = vector.shape_cast %229 : vector<4xf32> to vector<1x4xf32>
    %cst_103 = arith.constant dense<0.000000e+00> : vector<4xf32>
    %231 = vector.multi_reduction <add>, %221, %cst_103 [1] : vector<4x4xf32> to vector<4xf32>
    %232 = vector.shape_cast %231 : vector<4xf32> to vector<4x1xf32>
    %cst_104 = arith.constant dense<0.000000e+00> : vector<4xf32>
    %233 = vector.multi_reduction <add>, %221, %cst_104 [0] : vector<4x4xf32> to vector<4xf32>
    %234 = vector.shape_cast %233 : vector<4xf32> to vector<1x4xf32>
    %235 = math.log %228 : vector<4x1xf32>
    %236 = arith.subf %232, %228 : vector<4x1xf32>
    %237 = math.log %236 : vector<4x1xf32>
    %238 = arith.subf %235, %237 : vector<4x1xf32>
    %239 = vector.shape_cast %238 : vector<4x1xf32> to vector<1x4x1xf32>
    %cst_105 = arith.constant dense<0.000000e+00> : vector<1xf32>
    %240 = vector.multi_reduction <add>, %239, %cst_105 [1, 2] : vector<1x4x1xf32> to vector<1xf32>
    %241 = vector.shape_cast %240 : vector<1xf32> to vector<1x1x1xf32>
    %242 = vector.extract %241[0, 0, 0] : f32 from vector<1x1x1xf32>
    %cst_106 = arith.constant 0.000000e+00 : f32
    %243 = arith.subf %cst_106, %242 : f32
    %cst_107 = arith.constant 4.000000e+00 : f32
    %244 = arith.divf %243, %cst_107 : f32
    %245 = math.log %230 : vector<1x4xf32>
    %246 = arith.subf %234, %230 : vector<1x4xf32>
    %247 = math.log %246 : vector<1x4xf32>
    %248 = arith.subf %245, %247 : vector<1x4xf32>
    %249 = vector.shape_cast %248 : vector<1x4xf32> to vector<1x1x4xf32>
    %cst_108 = arith.constant dense<0.000000e+00> : vector<1xf32>
    %250 = vector.multi_reduction <add>, %249, %cst_108 [1, 2] : vector<1x1x4xf32> to vector<1xf32>
    %251 = vector.shape_cast %250 : vector<1xf32> to vector<1x1x1xf32>
    %252 = vector.extract %251[0, 0, 0] : f32 from vector<1x1x1xf32>
    %cst_109 = arith.constant 0.000000e+00 : f32
    %253 = arith.subf %cst_109, %252 : f32
    %cst_110 = arith.constant 4.000000e+00 : f32
    %254 = arith.divf %253, %cst_110 : f32
    %255 = arith.addf %244, %254 : f32
    %cst_111 = arith.constant 5.000000e-01 : f32
    %256 = arith.mulf %255, %cst_111 : f32
    %c0_112 = arith.constant 0 : index
    %c0_113 = arith.constant 0 : index
    %257 = memref.load %arg17[%c0_112, %c0_113] : memref<1x1xf32, #tpu.memory_space<smem>>
    memref.store %256, %arg17[%c0_112, %c0_113] : memref<1x1xf32, #tpu.memory_space<smem>>
    return
  }
}

</mosaic_0001>

<llo_original>
// kernel: forward.1
$region0: #{forward.1}
  #allocation0 [shape = 'u32[]', space=smem, size = 0x4, offset = 0x4, fixed_abs, tag = 'smem constant byte address 0x4 - core index']
  #allocation1 [shape = 'u32[72,128]{1,0:T(1,128)}', space=vmem, size = 0x9000, scoped, tag = 'internal scratch']
  %s0 = inlined_call_operand.vmem [shape: f32[5], index: 0, kind: input, shape index: {}]
  %s1 = inlined_call_operand.vmem [shape: f32[32,16], index: 1, kind: input, shape index: {}]
  %s2 = inlined_call_operand.vmem [shape: f32[32,32], index: 2, kind: input, shape index: {}]
  %s3 = inlined_call_operand.vmem [shape: f32[8,32], index: 3, kind: input, shape index: {}]
  %s4 = inlined_call_operand.vmem [shape: f32[8,32], index: 4, kind: input, shape index: {}]
  %s5 = inlined_call_operand.vmem [shape: f32[16,32], index: 5, kind: input, shape index: {}]
  %s6 = inlined_call_operand.hbm [shape: f32[32,32], index: 6, kind: input, shape index: {}]
  %s7 = inlined_call_operand.hbm [shape: f32[32,32], index: 7, kind: input, shape index: {}]
  %s8 = inlined_call_operand.vmem [shape: f32[3,32], index: 8, kind: input, shape index: {}]
  %s9 = inlined_call_operand.vmem [shape: f32[3,32], index: 9, kind: input, shape index: {}]
  %s10 = inlined_call_operand.hbm [shape: f32[3,32], index: 10, kind: input, shape index: {}]
  %s11 = inlined_call_operand.hbm [shape: f32[32,32], index: 11, kind: input, shape index: {}]
  %s12 = inlined_call_operand.vmem [shape: f32[1,32], index: 12, kind: input, shape index: {}]
  %s13 = inlined_call_operand.hbm [shape: f32[96,96], index: 13, kind: input, shape index: {}]
  %s14 = inlined_call_operand.vmem [shape: f32[1,96], index: 14, kind: input, shape index: {}]
  %s15 = inlined_call_operand.hbm [shape: f32[96,96], index: 15, kind: input, shape index: {}]
  %s16 = inlined_call_operand.vmem [shape: f32[1,96], index: 16, kind: input, shape index: {}]
  %s17 = inlined_call_operand.hbm [shape: f32[1,1], index: 17, kind: output, shape index: {}]
  %s18 = sld [smem:[#allocation0]]
  $region106: #{forward.1} parent=0
    _
  %s20 = ssub.s32 1, %s18
  %s21 = scalar_select 0, %s20, %s18
  $region1: #{forward.1} parent=0
    #allocation2 [shape = 'u8[512]{0}', space=smem, size = 0x200, scoped, tag = 'input window, operand 0, single buffered']
    #allocation3 [shape = 's32[1]{0}', space=sflag, size = 0x4, scoped, tag = 'scoped memory for forward.1']
    #allocation4 [shape = 's32[1]{0}', space=sflag, size = 0x4, scoped, tag = 'scoped memory for forward.1']
    #allocation5 [shape = 's32[1]{0}', space=sflag, size = 0x4, scoped, tag = 'scoped memory for forward.1']
    #allocation6 [shape = 'u8[16384]{0}', space=vmem, size = 0x4000, scoped, tag = 'input window, operand 6, single buffered']
    #allocation7 [shape = 'u8[16384]{0}', space=vmem, size = 0x4000, scoped, tag = 'input window, operand 7, single buffered']
    #allocation8 [shape = 's32[1]{0}', space=sflag, size = 0x4, scoped, tag = 'scoped memory for forward.1']
    #allocation9 [shape = 'u8[2048]{0}', space=vmem, size = 0x800, scoped, tag = 'input window, operand 10, single buffered']
    #allocation10 [shape = 'u8[16384]{0}', space=vmem, size = 0x4000, scoped, tag = 'input window, operand 11, single buffered']
    #allocation11 [shape = 's32[1]{0}', space=sflag, size = 0x4, scoped, tag = 'scoped memory for forward.1']
    #allocation12 [shape = 'u8[49152]{0}', space=vmem, size = 0xc000, scoped, tag = 'input window, operand 13, single buffered']
    #allocation13 [shape = 'u8[49152]{0}', space=vmem, size = 0xc000, scoped, tag = 'input window, operand 15, single buffered']
    #allocation14 [shape = 's32[1]{0}', space=sflag, size = 0x4, scoped, tag = 'scoped memory for forward.1']
    #allocation15 [shape = 'u8[512]{0}', space=smem, size = 0x200, scoped, tag = 'output window, operand 0, single buffered']
    %22 = vsyncpa [#allocation5], 0
    %23 = vsyncpa [#allocation3], 0
    %24 = vsyncpa [#allocation8], 0
    %25 = vsyncpa [#allocation11], 0
    %26 = vsyncpa [#allocation14], 0
    %27 = vsyncpa [#allocation4], 0
    // Predicated region
    $region2: #{forward.1} parent=1 // pred_check
      _
    $region3: #{forward.1} parent=1 // pred_check_branch
      %29 = sbr.rel (0) target = $region5
    $region4: #{forward.1} parent=1 // pred_region
      %31 = vsyncadd [#allocation5], 0
      %s33 = sshll.u32 %s0, 4
      %s34 = int_to_ptr.vmem [resolvable:$true] %s33
      %36 = dma.vmem_to_smem %s34, 16, [#allocation2], [#allocation5]
    $region5: #{forward.1} parent=1 // pred_fallthru
      _
    // Predicated region
    $region6: #{forward.1} parent=1 // pred_check
      _
    $region7: #{forward.1} parent=1 // pred_check_branch
      %38 = sbr.rel (0) target = $region9
    $region8: #{forward.1} parent=1 // pred_region
      _
    $region9: #{forward.1} parent=1 // pred_fallthru
      _
    // Predicated region
    $region10: #{forward.1} parent=1 // pred_check
      _
    $region11: #{forward.1} parent=1 // pred_check_branch
      %40 = sbr.rel (0) target = $region13
    $region12: #{forward.1} parent=1 // pred_region
      _
    $region13: #{forward.1} parent=1 // pred_fallthru
      _
    // Predicated region
    $region14: #{forward.1} parent=1 // pred_check
      _
    $region15: #{forward.1} parent=1 // pred_check_branch
      %42 = sbr.rel (0) target = $region17
    $region16: #{forward.1} parent=1 // pred_region
      _
    $region17: #{forward.1} parent=1 // pred_fallthru
      _
    // Predicated region
    $region18: #{forward.1} parent=1 // pred_check
      _
    $region19: #{forward.1} parent=1 // pred_check_branch
      %44 = sbr.rel (0) target = $region21
    $region20: #{forward.1} parent=1 // pred_region
      _
    $region21: #{forward.1} parent=1 // pred_fallthru
      _
    // Predicated region
    $region22: #{forward.1} parent=1 // pred_check
      _
    $region23: #{forward.1} parent=1 // pred_check_branch
      %46 = sbr.rel (0) target = $region25
    $region24: #{forward.1} parent=1 // pred_region
      _
    $region25: #{forward.1} parent=1 // pred_fallthru
      _
    // Predicated region
    $region26: #{forward.1} parent=1 // pred_check
      _
    $region27: #{forward.1} parent=1 // pred_check_branch
      %48 = sbr.rel (0) target = $region29
    $region28: #{forward.1} parent=1 // pred_region
      %50 = vsyncadd [#allocation3], 0
      %s51 = sshll.u32 %s6, 4
      %s52 = int_to_ptr.hbm [resolvable:$true] %s51
      %s53 = sshll.u32 [#allocation6], 4
      %s54 = int_to_ptr.vmem [resolvable:$true] %s53
      %59 = dma.hbm_to_vmem [thread:$0]  %s52, 512, %s54, [#allocation3], 128, 128, 8
    $region29: #{forward.1} parent=1 // pred_fallthru
      _
    // Predicated region
    $region30: #{forward.1} parent=1 // pred_check
      _
    $region31: #{forward.1} parent=1 // pred_check_branch
      %61 = sbr.rel (0) target = $region33
    $region32: #{forward.1} parent=1 // pred_region
      %63 = vsyncadd [#allocation8], 0
      %s64 = sshll.u32 %s7, 4
      %s65 = int_to_ptr.hbm [resolvable:$true] %s64
      %s66 = sshll.u32 [#allocation7], 4
      %s67 = int_to_ptr.vmem [resolvable:$true] %s66
      %72 = dma.hbm_to_vmem [thread:$0]  %s65, 512, %s67, [#allocation8], 128, 128, 8
    $region33: #{forward.1} parent=1 // pred_fallthru
      _
    // Predicated region
    $region34: #{forward.1} parent=1 // pred_check
      _
    $region35: #{forward.1} parent=1 // pred_check_branch
      %74 = sbr.rel (0) target = $region37
    $region36: #{forward.1} parent=1 // pred_region
      _
    $region37: #{forward.1} parent=1 // pred_fallthru
      _
    // Predicated region
    $region38: #{forward.1} parent=1 // pred_check
      _
    $region39: #{forward.1} parent=1 // pred_check_branch
      %76 = sbr.rel (0) target = $region41
    $region40: #{forward.1} parent=1 // pred_region
      _
    $region41: #{forward.1} parent=1 // pred_fallthru
      _
    // Predicated region
    $region42: #{forward.1} parent=1 // pred_check
      _
    $region43: #{forward.1} parent=1 // pred_check_branch
      %78 = sbr.rel (0) target = $region45
    $region44: #{forward.1} parent=1 // pred_region
      %80 = vsyncadd [#allocation8], 0
      %s82 = sshll.u32 %s10, 4
      %s83 = int_to_ptr.hbm [resolvable:$true] %s82
      %s84 = sshll.u32 [#allocation9], 4
      %s85 = int_to_ptr.vmem [resolvable:$true] %s84
      %87 = dma.hbm_to_vmem [thread:$0]  %s83, 64, %s85, [#allocation8]
    $region45: #{forward.1} parent=1 // pred_fallthru
      _
    // Predicated region
    $region46: #{forward.1} parent=1 // pred_check
      _
    $region47: #{forward.1} parent=1 // pred_check_branch
      %89 = sbr.rel (0) target = $region49
    $region48: #{forward.1} parent=1 // pred_region
      %91 = vsyncadd [#allocation11], 0
      %s92 = sshll.u32 %s11, 4
      %s93 = int_to_ptr.hbm [resolvable:$true] %s92
      %s94 = sshll.u32 [#allocation10], 4
      %s95 = int_to_ptr.vmem [resolvable:$true] %s94
      %100 = dma.hbm_to_vmem [thread:$0]  %s93, 512, %s95, [#allocation11], 128, 128, 8
    $region49: #{forward.1} parent=1 // pred_fallthru
      _
    // Predicated region
    $region50: #{forward.1} parent=1 // pred_check
      _
    $region51: #{forward.1} parent=1 // pred_check_branch
      %102 = sbr.rel (0) target = $region53
    $region52: #{forward.1} parent=1 // pred_region
      _
    $region53: #{forward.1} parent=1 // pred_fallthru
      _
    // Predicated region
    $region54: #{forward.1} parent=1 // pred_check
      _
    $region55: #{forward.1} parent=1 // pred_check_branch
      %104 = sbr.rel (0) target = $region57
    $region56: #{forward.1} parent=1 // pred_region
      %106 = vsyncadd [#allocation11], 0
      %s107 = sshll.u32 %s13, 4
      %s108 = int_to_ptr.hbm [resolvable:$true] %s107
      %s109 = sshll.u32 [#allocation12], 4
      %s110 = int_to_ptr.vmem [resolvable:$true] %s109
      %115 = dma.hbm_to_vmem [thread:$0]  %s108, 1536, %s110, [#allocation11], 128, 128, 8
    $region57: #{forward.1} parent=1 // pred_fallthru
      _
    // Predicated region
    $region58: #{forward.1} parent=1 // pred_check
      _
    $region59: #{forward.1} parent=1 // pred_check_branch
      %117 = sbr.rel (0) target = $region61
    $region60: #{forward.1} parent=1 // pred_region
      _
    $region61: #{forward.1} parent=1 // pred_fallthru
      _
    // Predicated region
    $region62: #{forward.1} parent=1 // pred_check
      _
    $region63: #{forward.1} parent=1 // pred_check_branch
      %119 = sbr.rel (0) target = $region65
    $region64: #{forward.1} parent=1 // pred_region
      %121 = vsyncadd [#allocation14], 0
      %s122 = sshll.u32 %s15, 4
      %s123 = int_to_ptr.hbm [resolvable:$true] %s122
      %s124 = sshll.u32 [#allocation13], 4
      %s125 = int_to_ptr.vmem [resolvable:$true] %s124
      %130 = dma.hbm_to_vmem [thread:$0]  %s123, 1536, %s125, [#allocation14], 128, 128, 8
    $region65: #{forward.1} parent=1 // pred_fallthru
      _
    // Predicated region
    $region66: #{forward.1} parent=1 // pred_check
      _
    $region67: #{forward.1} parent=1 // pred_check_branch
      %132 = sbr.rel (0) target = $region69
    $region68: #{forward.1} parent=1 // pred_region
      _
    $region69: #{forward.1} parent=1 // pred_fallthru
      _
    // Predicated region
    $region70: #{forward.1} parent=1 // pred_check
      _
    $region71: #{forward.1} parent=1 // pred_check_branch
      %134 = sbr.rel (0) target = $region73
    $region72: #{forward.1} parent=1 // pred_region
      %136 = dma.done [#allocation5], 16
    $region73: #{forward.1} parent=1 // pred_fallthru
      _
    // Predicated region
    $region74: #{forward.1} parent=1 // pred_check
      _
    $region75: #{forward.1} parent=1 // pred_check_branch
      %138 = sbr.rel (0) target = $region77
    $region76: #{forward.1} parent=1 // pred_region
      %140 = dma.done [#allocation3], 512
    $region77: #{forward.1} parent=1 // pred_fallthru
      _
    // Predicated region
    $region78: #{forward.1} parent=1 // pred_check
      _
    $region79: #{forward.1} parent=1 // pred_check_branch
      %142 = sbr.rel (0) target = $region81
    $region80: #{forward.1} parent=1 // pred_region
      %144 = dma.done [#allocation8], 512
    $region81: #{forward.1} parent=1 // pred_fallthru
      _
    // Predicated region
    $region82: #{forward.1} parent=1 // pred_check
      _
    $region83: #{forward.1} parent=1 // pred_check_branch
      %146 = sbr.rel (0) target = $region85
    $region84: #{forward.1} parent=1 // pred_region
      %148 = dma.done [#allocation8], 64
    $region85: #{forward.1} parent=1 // pred_fallthru
      _
    // Predicated region
    $region86: #{forward.1} parent=1 // pred_check
      _
    $region87: #{forward.1} parent=1 // pred_check_branch
      %150 = sbr.rel (0) target = $region89
    $region88: #{forward.1} parent=1 // pred_region
      %152 = dma.done [#allocation11], 512
    $region89: #{forward.1} parent=1 // pred_fallthru
      _
    // Predicated region
    $region90: #{forward.1} parent=1 // pred_check
      _
    $region91: #{forward.1} parent=1 // pred_check_branch
      %154 = sbr.rel (0) target = $region93
    $region92: #{forward.1} parent=1 // pred_region
      %156 = dma.done [#allocation11], 1536
    $region93: #{forward.1} parent=1 // pred_fallthru
      _
    // Predicated region
    $region94: #{forward.1} parent=1 // pred_check
      _
    $region95: #{forward.1} parent=1 // pred_check_branch
      %158 = sbr.rel (0) target = $region97
    $region96: #{forward.1} parent=1 // pred_region
      %160 = dma.done [#allocation14], 1536
    $region97: #{forward.1} parent=1 // pred_fallthru
      _
    %161 = sfence
    %v162 = vld [vmem:[%s2] sm:$0xff]
    %v163 = vld [vmem:[%s2 + $0x8] sm:$0xff]
    %v164 = vld [vmem:[%s2 + $0x10] sm:$0xff]
    %v165 = vld [vmem:[%s2 + $0x18] sm:$0xff]
    %v166 = vld [vmem:[%s3] sm:$0xff]
    %v167 = vld [vmem:[%s4] sm:$0xff]
    %v168 = vld [vmem:[#allocation10] sm:$0xff]
    %v169 = vld [vmem:[#allocation10 + $0x8] sm:$0xff]
    %v170 = vld [vmem:[#allocation10 + $0x10] sm:$0xff]
    %v171 = vld [vmem:[#allocation10 + $0x18] sm:$0xff]
    %v172 = vld [vmem:[%s12] sm:$0x1]
    %s173 = sld [smem:[#allocation2 + $0x3]]
    %s174 = sld [smem:[#allocation2 + $0x4]]
    %v175 = vstv %s174
    %v176 = vrcp.pop %v175
    %v177 = vmul.f32 %v175, %v176
    %v178 = vsub.f32 1.0, %v177
    %v179 = vmul.f32 %v176, %v178
    %v180 = vadd.f32 %v176, %v179
    %vm181 = vweird.f32 %v175
    %vm182 = vweird.f32 %v176
    %vm183 = vmor %vm181, %vm182
    %v184 = vsel %vm183, %v176, %v180
    %v185 = vand.u32 2147483647, %v175
    %vm186 = vcmp.eq.f32.partialorder %v185, 8.507059e+37
    %v187 = vand.u32 %v175, 2147483648
    %v188 = vor.u32 1.1754944e-38, %v187
    %v189 = vsel %vm186, %v188, %v184
    %s190 = vtos %v189
    %v191 = vld [vmem:[%s1] sm:$0xff]
    %v192 = vld [vmem:[%s1 + $0x8] sm:$0xff]
    %v193 = vld [vmem:[%s1 + $0x10] sm:$0xff]
    %v194 = vld [vmem:[%s1 + $0x18] sm:$0xff]
    %vm195 = vcmask 261120
    %v197 = vsel %vm195, %v162, 0
    %v200 = vsel %vm195, %v163, 0
    %v203 = vsel %vm195, %v164, 0
    %v206 = vsel %vm195, %v165, 0
    %208 = vmatpush.msra.mxu0 0.0
    %209 = vmatpush.msra.mxu0 0.0
    %210 = vmatpush.msra.mxu0 0.0
    %211 = vmatpush.msra.mxu0 0.0
    %212 = vmatpush.msra.mxu0 0.0
    %213 = vmatpush.msra.mxu0 0.0
    %214 = vmatpush.msra.mxu0 0.0
    %215 = vmatpush.msra.mxu0 0.0
    %216 = vmatpush.msra.mxu0 0.0
    %217 = vmatpush.msra.mxu0 0.0
    %218 = vmatpush.msra.mxu0 0.0
    %219 = vmatpush.msra.mxu0 0.0
    %220 = vmatpush.msra.mxu0 %v194
    %221 = vmatpush.msra.mxu0 %v193
    %222 = vmatpush.msra.mxu0 %v192
    %223 = vmatpush.msra.mxu0 %v191
    %224 = vmatmul.f32.gmra.mxu0 %v197
    %v225 = vpop.f32.mrf.mxu0
    %v226 = vadd.f32 0.0, %v225
    %227 = vmatmul.f32.gmra.mxu0 %v200
    %v228 = vpop.f32.mrf.mxu0
    %v229 = vadd.f32 0.0, %v228
    %230 = vmatmul.f32.gmra.mxu0 %v203
    %v231 = vpop.f32.mrf.mxu0
    %v232 = vadd.f32 0.0, %v231
    %233 = vmatmul.f32.gmra.mxu0 %v206
    %v234 = vpop.f32.mrf.mxu0
    %v235 = vadd.f32 0.0, %v234
    %236 = vdwg.mxu0
    %s237 = sld [smem:[#allocation2]]
    %s238 = sadd.f32 %s237, 1.0
    %v239 = vstv %s238
    %v240 = vmul.f32 %v239, %v191
    %v241 = vmul.f32 %v239, %v192
    %v242 = vmul.f32 %v239, %v193
    %v243 = vmul.f32 %v239, %v194
    %v244 = vadd.f32 %v240, %v226
    %v245 = vadd.f32 %v241, %v229
    %v246 = vadd.f32 %v242, %v232
    %v247 = vadd.f32 %v243, %v235
    %v248 = vld [vmem:[%s5] sm:$0xff]
    %v249 = vld [vmem:[%s5 + $0x8] sm:$0xff]
    %v250 = vld [vmem:[%s8] sm:$0x1]
    %v251 = vperm.slane %v250, 0
    %vm252 = vcmask 130048
    %v254 = vsel %vm252, %v244, 0
    %v257 = vsel %vm252, %v245, 0
    %v260 = vsel %vm252, %v246, 0
    %v263 = vsel %vm252, %v247, 0
    %265 = vmatpush.msra.mxu0 0.0
    %266 = vmatpush.msra.mxu0 0.0
    %267 = vmatpush.msra.mxu0 0.0
    %268 = vmatpush.msra.mxu0 0.0
    %269 = vmatpush.msra.mxu0 0.0
    %270 = vmatpush.msra.mxu0 0.0
    %271 = vmatpush.msra.mxu0 0.0
    %272 = vmatpush.msra.mxu0 0.0
    %273 = vmatpush.msra.mxu0 0.0
    %274 = vmatpush.msra.mxu0 0.0
    %275 = vmatpush.msra.mxu0 0.0
    %276 = vmatpush.msra.mxu0 0.0
    %277 = vmatpush.msra.mxu0 0.0
    %278 = vmatpush.msra.mxu0 0.0
    %279 = vmatpush.msra.mxu0 %v249
    %280 = vmatpush.msra.mxu0 %v248
    %281 = vmatmul.f32.gmra.mxu0 %v254
    %v282 = vpop.f32.mrf.mxu0
    %v283 = vadd.f32 %v251, %v282
    %284 = vmatmul.f32.gmra.mxu0 %v257
    %v285 = vpop.f32.mrf.mxu0
    %v286 = vadd.f32 %v251, %v285
    %287 = vmatmul.f32.gmra.mxu0 %v260
    %v288 = vpop.f32.mrf.mxu0
    %v289 = vadd.f32 %v251, %v288
    %290 = vmatmul.f32.gmra.mxu0 %v263
    %v291 = vpop.f32.mrf.mxu0
    %v292 = vadd.f32 %v251, %v291
    %293 = vdwg.mxu0
    %v294 = vmax.f32 %v283, 0.0
    %v295 = vmax.f32 %v286, 0.0
    %v296 = vmax.f32 %v289, 0.0
    %v297 = vmax.f32 %v292, 0.0
    %v298 = vsel %vm195, %v294, 0.0
    %v299 = vsel %vm195, %v295, 0.0
    %v300 = vadd.f32 %v298, %v299
    %v301 = vsel %vm195, %v296, 0.0
    %v302 = vadd.f32 %v300, %v301
    %v303 = vsel %vm195, %v297, 0.0
    %v304 = vadd.f32 %v302, %v303
    %v305 = vrot.slane %v304, 4
    %v306 = vadd.f32 %v304, %v305
    %v307 = vrot.slane %v306, 2
    %v308 = vadd.f32 %v306, %v307
    %v309 = vrot.slane %v308, 1
    %v310 = vadd.f32 %v308, %v309
    %v311 = vmul.f32 %v310, 0.03125
    %v312 = vmul.f32 %v294, %v294
    %v313 = vmul.f32 %v295, %v295
    %v314 = vmul.f32 %v296, %v296
    %v315 = vmul.f32 %v297, %v297
    %v316 = vsel %vm195, %v312, 0.0
    %v317 = vsel %vm195, %v313, 0.0
    %v318 = vadd.f32 %v316, %v317
    %v319 = vsel %vm195, %v314, 0.0
    %v320 = vadd.f32 %v318, %v319
    %v321 = vsel %vm195, %v315, 0.0
    %v322 = vadd.f32 %v320, %v321
    %v323 = vrot.slane %v322, 4
    %v324 = vadd.f32 %v322, %v323
    %v325 = vrot.slane %v324, 2
    %v326 = vadd.f32 %v324, %v325
    %v327 = vrot.slane %v326, 1
    %v328 = vadd.f32 %v326, %v327
    %v329 = vmul.f32 %v328, 0.03125
    %v330 = vmul.f32 %v311, %v311
    %v331 = vsub.f32 %v329, %v330
    %v332 = vld [vmem:[%s9] sm:$0x1]
    %v333 = vadd.f32 %v331, 1e-05
    %v334 = vrsqrt.pop %v333
    %v335 = vmul.f32 %v334, %v333
    %v336 = vmul.f32 %v335, %v334
    %v337 = vmul.f32 0.5, %v336
    %v338 = vsub.f32 1.5, %v337
    %v339 = vmul.f32 %v334, %v338
    %vm340 = vweird.f32 %v333
    %vm341 = vweird.f32 %v334
    %vm342 = vmor %vm340, %vm341
    %v343 = vsel %vm342, %v334, %v339
    %v344 = vmul.f32 %v332, %v343
    %v345 = vld [vmem:[#allocation9] sm:$0x1]
    %v346 = vmul.f32 %v344, %v311
    %v347 = vsub.f32 %v345, %v346
    %v348 = vperm.slane %v344, 0
    %v349 = vmul.f32 %v348, %v294
    %v350 = vmul.f32 %v348, %v295
    %v351 = vmul.f32 %v348, %v296
    %v352 = vmul.f32 %v348, %v297
    %v353 = vperm.slane %v347, 0
    %v354 = vadd.f32 %v349, %v353
    %v355 = vadd.f32 %v350, %v353
    %v356 = vadd.f32 %v351, %v353
    %v357 = vadd.f32 %v352, %v353
    %358 = vmatpush.msra.mxu0 0.0
    %359 = vmatpush.msra.mxu0 0.0
    %360 = vmatpush.msra.mxu0 0.0
    %361 = vmatpush.msra.mxu0 0.0
    %362 = vmatpush.msra.mxu0 0.0
    %363 = vmatpush.msra.mxu0 0.0
    %364 = vmatpush.msra.mxu0 0.0
    %365 = vmatpush.msra.mxu0 0.0
    %366 = vmatpush.msra.mxu0 0.0
    %367 = vmatpush.msra.mxu0 0.0
    %368 = vmatpush.msra.mxu0 0.0
    %369 = vmatpush.msra.mxu0 0.0
    %370 = vmatpush.msra.mxu0 %v357
    %371 = vmatpush.msra.mxu0 %v356
    %372 = vmatpush.msra.mxu0 %v355
    %373 = vmatpush.msra.mxu0 %v354
    %374 = vmatmul.f32.gmra.mxu0 %v197
    %v375 = vpop.f32.mrf.mxu0
    %v376 = vadd.f32 0.0, %v375
    %377 = vmatmul.f32.gmra.mxu0 %v200
    %v378 = vpop.f32.mrf.mxu0
    %v379 = vadd.f32 0.0, %v378
    %380 = vmatmul.f32.gmra.mxu0 %v203
    %v381 = vpop.f32.mrf.mxu0
    %v382 = vadd.f32 0.0, %v381
    %383 = vmatmul.f32.gmra.mxu0 %v206
    %v384 = vpop.f32.mrf.mxu0
    %v385 = vadd.f32 0.0, %v384
    %386 = vdwg.mxu0
    %s387 = sadd.f32 %s173, 1.0
    %v388 = vstv %s387
    %v389 = vmul.f32 %v388, %v354
    %v390 = vmul.f32 %v388, %v355
    %v391 = vmul.f32 %v388, %v356
    %v392 = vmul.f32 %v388, %v357
    %v393 = vadd.f32 %v389, %v376
    %v394 = vadd.f32 %v390, %v379
    %v395 = vadd.f32 %v391, %v382
    %v396 = vadd.f32 %v392, %v385
    %v398 = vperm.slane %v172, 0
    %v401 = vsel %vm195, %v393, 0
    %v404 = vsel %vm195, %v394, 0
    %v407 = vsel %vm195, %v395, 0
    %v410 = vsel %vm195, %v396, 0
    %412 = vmatpush.msra.mxu0 0.0
    %413 = vmatpush.msra.mxu0 0.0
    %414 = vmatpush.msra.mxu0 0.0
    %415 = vmatpush.msra.mxu0 0.0
    %416 = vmatpush.msra.mxu0 0.0
    %417 = vmatpush.msra.mxu0 0.0
    %418 = vmatpush.msra.mxu0 0.0
    %419 = vmatpush.msra.mxu0 0.0
    %420 = vmatpush.msra.mxu0 0.0
    %421 = vmatpush.msra.mxu0 0.0
    %422 = vmatpush.msra.mxu0 0.0
    %423 = vmatpush.msra.mxu0 0.0
    %424 = vmatpush.msra.mxu0 %v171
    %425 = vmatpush.msra.mxu0 %v170
    %426 = vmatpush.msra.mxu0 %v169
    %427 = vmatpush.msra.mxu0 %v168
    %428 = vmatmul.f32.gmra.mxu0 %v401
    %v429 = vpop.f32.mrf.mxu0
    %v430 = vadd.f32 %v398, %v429
    %431 = vmatmul.f32.gmra.mxu0 %v404
    %v432 = vpop.f32.mrf.mxu0
    %v433 = vadd.f32 %v398, %v432
    %434 = vmatmul.f32.gmra.mxu0 %v407
    %v435 = vpop.f32.mrf.mxu0
    %v436 = vadd.f32 %v398, %v435
    %437 = vmatmul.f32.gmra.mxu0 %v410
    %v438 = vpop.f32.mrf.mxu0
    %v439 = vadd.f32 %v398, %v438
    %440 = vdwg.mxu0
    %v441 = vmax.f32 %v430, 0.0
    %v442 = vmax.f32 %v433, 0.0
    %v443 = vmax.f32 %v436, 0.0
    %v444 = vmax.f32 %v439, 0.0
    %v446 = vsel %vm195, %v167, 0
    %448 = vmatpush.msra.mxu0 0.0
    %449 = vmatpush.msra.mxu0 0.0
    %450 = vmatpush.msra.mxu0 0.0
    %451 = vmatpush.msra.mxu0 0.0
    %452 = vmatpush.msra.mxu0 0.0
    %453 = vmatpush.msra.mxu0 0.0
    %454 = vmatpush.msra.mxu0 0.0
    %455 = vmatpush.msra.mxu0 0.0
    %456 = vmatpush.msra.mxu0 0.0
    %457 = vmatpush.msra.mxu0 0.0
    %458 = vmatpush.msra.mxu0 0.0
    %459 = vmatpush.msra.mxu0 0.0
    %460 = vmatpush.msra.mxu0 %v444
    %461 = vmatpush.msra.mxu0 %v443
    %462 = vmatpush.msra.mxu0 %v442
    %463 = vmatpush.msra.mxu0 %v441
    %464 = vmatmul.f32.gmra.mxu0 %v446
    %v465 = vpop.f32.mrf.mxu0
    %v466 = vadd.f32 0.0, %v465
    %467 = vdwg.mxu0
    %v469 = vsel %vm195, %v166, 0
    %471 = vmatpush.msra.mxu0 0.0
    %472 = vmatpush.msra.mxu0 0.0
    %473 = vmatpush.msra.mxu0 0.0
    %474 = vmatpush.msra.mxu0 0.0
    %475 = vmatpush.msra.mxu0 0.0
    %476 = vmatpush.msra.mxu0 0.0
    %477 = vmatpush.msra.mxu0 0.0
    %478 = vmatpush.msra.mxu0 0.0
    %479 = vmatpush.msra.mxu0 0.0
    %480 = vmatpush.msra.mxu0 0.0
    %481 = vmatpush.msra.mxu0 0.0
    %482 = vmatpush.msra.mxu0 0.0
    %483 = vmatpush.msra.mxu0 %v357
    %484 = vmatpush.msra.mxu0 %v356
    %485 = vmatpush.msra.mxu0 %v355
    %486 = vmatpush.msra.mxu0 %v354
    %487 = vmatmul.f32.gmra.mxu0 %v469
    %v488 = vpop.f32.mrf.mxu0
    %v489 = vadd.f32 %v466, %v488
    %490 = vdwg.mxu0
    %v491 = vlaneseq
    %v492 = vshrl.u32 %v491, 7
    %v493 = vadd.s32 %v492, 8
    %v494 = vadd.s32 %v492, 16
    %v495 = vadd.s32 %v492, 24
    %v496 = vlaneseq
    %v497 = vand.u32 %v496, 127
    %vm498 = vcmp.eq.s32.totalorder %v497, %v492
    %vm499 = vcmp.eq.s32.totalorder %v497, %v493
    %vm500 = vcmp.eq.s32.totalorder %v497, %v494
    %vm501 = vcmp.eq.s32.totalorder %v497, %v495
    %v502 = vsel %vm498, 1, 0
    %v503 = vsel %vm499, 1, 0
    %v504 = vsel %vm500, 1, 0
    %v505 = vsel %vm501, 1, 0
    %v506 = vcvt.s32.f32 %v502
    %v507 = vcvt.s32.f32 %v503
    %v508 = vcvt.s32.f32 %v504
    %v509 = vcvt.s32.f32 %v505
    %s510 = sld [smem:[#allocation2 + $0x1]]
    %s511 = sadd.f32 %s510, 1.0
    %v512 = vstv %s511
    %v513 = vmul.f32 %v512, %v354
    %v514 = vmul.f32 %v512, %v355
    %v515 = vmul.f32 %v512, %v356
    %v516 = vmul.f32 %v512, %v357
    %v517 = vadd.f32 %v513, %v376
    %v518 = vadd.f32 %v514, %v379
    %v519 = vadd.f32 %v515, %v382
    %v520 = vadd.f32 %v516, %v385
    %v521 = vld [vmem:[#allocation6] sm:$0xff]
    %v522 = vld [vmem:[#allocation6 + $0x8] sm:$0xff]
    %v523 = vld [vmem:[#allocation6 + $0x10] sm:$0xff]
    %v524 = vld [vmem:[#allocation6 + $0x18] sm:$0xff]
    %v525 = vld [vmem:[%s8 + $0x1] sm:$0x1]
    %v526 = vperm.slane %v525, 0
    %v528 = vsel %vm195, %v517, 0
    %v531 = vsel %vm195, %v518, 0
    %v534 = vsel %vm195, %v519, 0
    %v537 = vsel %vm195, %v520, 0
    %539 = vmatpush.msra.mxu0 0.0
    %540 = vmatpush.msra.mxu0 0.0
    %541 = vmatpush.msra.mxu0 0.0
    %542 = vmatpush.msra.mxu0 0.0
    %543 = vmatpush.msra.mxu0 0.0
    %544 = vmatpush.msra.mxu0 0.0
    %545 = vmatpush.msra.mxu0 0.0
    %546 = vmatpush.msra.mxu0 0.0
    %547 = vmatpush.msra.mxu0 0.0
    %548 = vmatpush.msra.mxu0 0.0
    %549 = vmatpush.msra.mxu0 0.0
    %550 = vmatpush.msra.mxu0 0.0
    %551 = vmatpush.msra.mxu0 %v524
    %552 = vmatpush.msra.mxu0 %v523
    %553 = vmatpush.msra.mxu0 %v522
    %554 = vmatpush.msra.mxu0 %v521
    %555 = vmatmul.f32.gmra.mxu0 %v528
    %v556 = vpop.f32.mrf.mxu0
    %v557 = vadd.f32 %v526, %v556
    %558 = vmatmul.f32.gmra.mxu0 %v531
    %v559 = vpop.f32.mrf.mxu0
    %v560 = vadd.f32 %v526, %v559
    %561 = vmatmul.f32.gmra.mxu0 %v534
    %v562 = vpop.f32.mrf.mxu0
    %v563 = vadd.f32 %v526, %v562
    %564 = vmatmul.f32.gmra.mxu0 %v537
    %v565 = vpop.f32.mrf.mxu0
    %v566 = vadd.f32 %v526, %v565
    %567 = vdwg.mxu0
    %v568 = vmax.f32 %v557, 0.0
    %v569 = vmax.f32 %v560, 0.0
    %v570 = vmax.f32 %v563, 0.0
    %v571 = vmax.f32 %v566, 0.0
    %v572 = vsel %vm195, %v568, 0.0
    %v573 = vsel %vm195, %v569, 0.0
    %v574 = vadd.f32 %v572, %v573
    %v575 = vsel %vm195, %v570, 0.0
    %v576 = vadd.f32 %v574, %v575
    %v577 = vsel %vm195, %v571, 0.0
    %v578 = vadd.f32 %v576, %v577
    %v579 = vrot.slane %v578, 4
    %v580 = vadd.f32 %v578, %v579
    %v581 = vrot.slane %v580, 2
    %v582 = vadd.f32 %v580, %v581
    %v583 = vrot.slane %v582, 1
    %v584 = vadd.f32 %v582, %v583
    %v585 = vmul.f32 %v584, 0.03125
    %v586 = vmul.f32 %v568, %v568
    %v587 = vmul.f32 %v569, %v569
    %v588 = vmul.f32 %v570, %v570
    %v589 = vmul.f32 %v571, %v571
    %v590 = vsel %vm195, %v586, 0.0
    %v591 = vsel %vm195, %v587, 0.0
    %v592 = vadd.f32 %v590, %v591
    %v593 = vsel %vm195, %v588, 0.0
    %v594 = vadd.f32 %v592, %v593
    %v595 = vsel %vm195, %v589, 0.0
    %v596 = vadd.f32 %v594, %v595
    %v597 = vrot.slane %v596, 4
    %v598 = vadd.f32 %v596, %v597
    %v599 = vrot.slane %v598, 2
    %v600 = vadd.f32 %v598, %v599
    %v601 = vrot.slane %v600, 1
    %v602 = vadd.f32 %v600, %v601
    %v603 = vmul.f32 %v602, 0.03125
    %v604 = vmul.f32 %v585, %v585
    %v605 = vsub.f32 %v603, %v604
    %v606 = vld [vmem:[%s9 + $0x1] sm:$0x1]
    %v607 = vadd.f32 %v605, 1e-05
    %v608 = vrsqrt.pop %v607
    %v609 = vmul.f32 %v608, %v607
    %v610 = vmul.f32 %v609, %v608
    %v611 = vmul.f32 0.5, %v610
    %v612 = vsub.f32 1.5, %v611
    %v613 = vmul.f32 %v608, %v612
    %vm614 = vweird.f32 %v607
    %vm615 = vweird.f32 %v608
    %vm616 = vmor %vm614, %vm615
    %v617 = vsel %vm616, %v608, %v613
    %v618 = vmul.f32 %v606, %v617
    %v619 = vld [vmem:[#allocation9 + $0x1] sm:$0x1]
    %v620 = vmul.f32 %v618, %v585
    %v621 = vsub.f32 %v619, %v620
    %v622 = vperm.slane %v618, 0
    %v623 = vmul.f32 %v622, %v568
    %v624 = vmul.f32 %v622, %v569
    %v625 = vmul.f32 %v622, %v570
    %v626 = vmul.f32 %v622, %v571
    %v627 = vperm.slane %v621, 0
    %v628 = vadd.f32 %v623, %v627
    %v629 = vadd.f32 %v624, %v627
    %v630 = vadd.f32 %v625, %v627
    %v631 = vadd.f32 %v626, %v627
    %632 = vmatpush.msra.mxu0 0.0
    %633 = vmatpush.msra.mxu0 0.0
    %634 = vmatpush.msra.mxu0 0.0
    %635 = vmatpush.msra.mxu0 0.0
    %636 = vmatpush.msra.mxu0 0.0
    %637 = vmatpush.msra.mxu0 0.0
    %638 = vmatpush.msra.mxu0 0.0
    %639 = vmatpush.msra.mxu0 0.0
    %640 = vmatpush.msra.mxu0 0.0
    %641 = vmatpush.msra.mxu0 0.0
    %642 = vmatpush.msra.mxu0 0.0
    %643 = vmatpush.msra.mxu0 0.0
    %644 = vmatpush.msra.mxu0 %v631
    %645 = vmatpush.msra.mxu0 %v630
    %646 = vmatpush.msra.mxu0 %v629
    %647 = vmatpush.msra.mxu0 %v628
    %648 = vmatmul.f32.gmra.mxu0 %v197
    %v649 = vpop.f32.mrf.mxu0
    %v650 = vadd.f32 0.0, %v649
    %651 = vmatmul.f32.gmra.mxu0 %v200
    %v652 = vpop.f32.mrf.mxu0
    %v653 = vadd.f32 0.0, %v652
    %654 = vmatmul.f32.gmra.mxu0 %v203
    %v655 = vpop.f32.mrf.mxu0
    %v656 = vadd.f32 0.0, %v655
    %657 = vmatmul.f32.gmra.mxu0 %v206
    %v658 = vpop.f32.mrf.mxu0
    %v659 = vadd.f32 0.0, %v658
    %660 = vdwg.mxu0
    %v661 = vmul.f32 %v388, %v628
    %v662 = vmul.f32 %v388, %v629
    %v663 = vmul.f32 %v388, %v630
    %v664 = vmul.f32 %v388, %v631
    %v665 = vadd.f32 %v661, %v650
    %v666 = vadd.f32 %v662, %v653
    %v667 = vadd.f32 %v663, %v656
    %v668 = vadd.f32 %v664, %v659
    %v670 = vsel %vm195, %v665, 0
    %v673 = vsel %vm195, %v666, 0
    %v676 = vsel %vm195, %v667, 0
    %v679 = vsel %vm195, %v668, 0
    %681 = vmatpush.msra.mxu0 0.0
    %682 = vmatpush.msra.mxu0 0.0
    %683 = vmatpush.msra.mxu0 0.0
    %684 = vmatpush.msra.mxu0 0.0
    %685 = vmatpush.msra.mxu0 0.0
    %686 = vmatpush.msra.mxu0 0.0
    %687 = vmatpush.msra.mxu0 0.0
    %688 = vmatpush.msra.mxu0 0.0
    %689 = vmatpush.msra.mxu0 0.0
    %690 = vmatpush.msra.mxu0 0.0
    %691 = vmatpush.msra.mxu0 0.0
    %692 = vmatpush.msra.mxu0 0.0
    %693 = vmatpush.msra.mxu0 %v171
    %694 = vmatpush.msra.mxu0 %v170
    %695 = vmatpush.msra.mxu0 %v169
    %696 = vmatpush.msra.mxu0 %v168
    %697 = vmatmul.f32.gmra.mxu0 %v670
    %v698 = vpop.f32.mrf.mxu0
    %v699 = vadd.f32 %v398, %v698
    %700 = vmatmul.f32.gmra.mxu0 %v673
    %v701 = vpop.f32.mrf.mxu0
    %v702 = vadd.f32 %v398, %v701
    %703 = vmatmul.f32.gmra.mxu0 %v676
    %v704 = vpop.f32.mrf.mxu0
    %v705 = vadd.f32 %v398, %v704
    %706 = vmatmul.f32.gmra.mxu0 %v679
    %v707 = vpop.f32.mrf.mxu0
    %v708 = vadd.f32 %v398, %v707
    %709 = vdwg.mxu0
    %v710 = vmax.f32 %v699, 0.0
    %v711 = vmax.f32 %v702, 0.0
    %v712 = vmax.f32 %v705, 0.0
    %v713 = vmax.f32 %v708, 0.0
    %714 = vmatpush.msra.mxu0 0.0
    %715 = vmatpush.msra.mxu0 0.0
    %716 = vmatpush.msra.mxu0 0.0
    %717 = vmatpush.msra.mxu0 0.0
    %718 = vmatpush.msra.mxu0 0.0
    %719 = vmatpush.msra.mxu0 0.0
    %720 = vmatpush.msra.mxu0 0.0
    %721 = vmatpush.msra.mxu0 0.0
    %722 = vmatpush.msra.mxu0 0.0
    %723 = vmatpush.msra.mxu0 0.0
    %724 = vmatpush.msra.mxu0 0.0
    %725 = vmatpush.msra.mxu0 0.0
    %726 = vmatpush.msra.mxu0 %v713
    %727 = vmatpush.msra.mxu0 %v712
    %728 = vmatpush.msra.mxu0 %v711
    %729 = vmatpush.msra.mxu0 %v710
    %730 = vmatmul.f32.gmra.mxu0 %v446
    %v731 = vpop.f32.mrf.mxu0
    %v732 = vadd.f32 0.0, %v731
    %733 = vdwg.mxu0
    %734 = vmatpush.msra.mxu0 0.0
    %735 = vmatpush.msra.mxu0 0.0
    %736 = vmatpush.msra.mxu0 0.0
    %737 = vmatpush.msra.mxu0 0.0
    %738 = vmatpush.msra.mxu0 0.0
    %739 = vmatpush.msra.mxu0 0.0
    %740 = vmatpush.msra.mxu0 0.0
    %741 = vmatpush.msra.mxu0 0.0
    %742 = vmatpush.msra.mxu0 0.0
    %743 = vmatpush.msra.mxu0 0.0
    %744 = vmatpush.msra.mxu0 0.0
    %745 = vmatpush.msra.mxu0 0.0
    %746 = vmatpush.msra.mxu0 %v631
    %747 = vmatpush.msra.mxu0 %v630
    %748 = vmatpush.msra.mxu0 %v629
    %749 = vmatpush.msra.mxu0 %v628
    %750 = vmatmul.f32.gmra.mxu0 %v469
    %v751 = vpop.f32.mrf.mxu0
    %v752 = vadd.f32 %v732, %v751
    %753 = vdwg.mxu0
    %v754 = vadd.s32 %v492, 32
    %v755 = vadd.s32 %v493, 32
    %v756 = vadd.s32 %v494, 32
    %v757 = vadd.s32 %v495, 32
    %vm758 = vcmp.eq.s32.totalorder %v497, %v754
    %vm759 = vcmp.eq.s32.totalorder %v497, %v755
    %vm760 = vcmp.eq.s32.totalorder %v497, %v756
    %vm761 = vcmp.eq.s32.totalorder %v497, %v757
    %v762 = vsel %vm758, 1, 0
    %v763 = vsel %vm759, 1, 0
    %v764 = vsel %vm760, 1, 0
    %v765 = vsel %vm761, 1, 0
    %v766 = vcvt.s32.f32 %v762
    %v767 = vcvt.s32.f32 %v763
    %v768 = vcvt.s32.f32 %v764
    %v769 = vcvt.s32.f32 %v765
    %v771 = vsel %vm195, %v752, 0
    %773 = vmatpush.msra.mxu0 0.0
    %774 = vmatpush.msra.mxu0 0.0
    %775 = vmatpush.msra.mxu0 0.0
    %776 = vmatpush.msra.mxu0 0.0
    %777 = vmatpush.msra.mxu0 0.0
    %778 = vmatpush.msra.mxu0 0.0
    %779 = vmatpush.msra.mxu0 0.0
    %780 = vmatpush.msra.mxu0 0.0
    %781 = vmatpush.msra.mxu0 0.0
    %782 = vmatpush.msra.mxu0 0.0
    %783 = vmatpush.msra.mxu0 0.0
    %784 = vmatpush.msra.mxu0 0.0
    %785 = vmatpush.msra.mxu0 %v769
    %786 = vmatpush.msra.mxu0 %v768
    %787 = vmatpush.msra.mxu0 %v767
    %788 = vmatpush.msra.mxu0 %v766
    %789 = vmatmul.f32.gmra.mxu0 %v771
    %v790 = vpop.f32.mrf.mxu0
    %v791 = vadd.f32 0.0, %v790
    %792 = vdwg.mxu0
    %v794 = vsel %vm195, %v489, 0
    %796 = vmatpush.msra.mxu0 0.0
    %797 = vmatpush.msra.mxu0 0.0
    %798 = vmatpush.msra.mxu0 0.0
    %799 = vmatpush.msra.mxu0 0.0
    %800 = vmatpush.msra.mxu0 0.0
    %801 = vmatpush.msra.mxu0 0.0
    %802 = vmatpush.msra.mxu0 0.0
    %803 = vmatpush.msra.mxu0 0.0
    %804 = vmatpush.msra.mxu0 0.0
    %805 = vmatpush.msra.mxu0 0.0
    %806 = vmatpush.msra.mxu0 0.0
    %807 = vmatpush.msra.mxu0 0.0
    %808 = vmatpush.msra.mxu0 %v509
    %809 = vmatpush.msra.mxu0 %v508
    %810 = vmatpush.msra.mxu0 %v507
    %811 = vmatpush.msra.mxu0 %v506
    %812 = vmatmul.f32.gmra.mxu0 %v794
    %v813 = vpop.f32.mrf.mxu0
    %v814 = vadd.f32 %v791, %v813
    %815 = vdwg.mxu0
    %s816 = sld [smem:[#allocation2 + $0x2]]
    %s817 = sadd.f32 %s816, 1.0
    %v818 = vstv %s817
    %v819 = vmul.f32 %v818, %v628
    %v820 = vmul.f32 %v818, %v629
    %v821 = vmul.f32 %v818, %v630
    %v822 = vmul.f32 %v818, %v631
    %v823 = vadd.f32 %v819, %v650
    %v824 = vadd.f32 %v820, %v653
    %v825 = vadd.f32 %v821, %v656
    %v826 = vadd.f32 %v822, %v659
    %v827 = vld [vmem:[#allocation7] sm:$0xff]
    %v828 = vld [vmem:[#allocation7 + $0x8] sm:$0xff]
    %v829 = vld [vmem:[#allocation7 + $0x10] sm:$0xff]
    %v830 = vld [vmem:[#allocation7 + $0x18] sm:$0xff]
    %v831 = vld [vmem:[%s8 + $0x2] sm:$0x1]
    %v832 = vperm.slane %v831, 0
    %v834 = vsel %vm195, %v823, 0
    %v837 = vsel %vm195, %v824, 0
    %v840 = vsel %vm195, %v825, 0
    %v843 = vsel %vm195, %v826, 0
    %845 = vmatpush.msra.mxu0 0.0
    %846 = vmatpush.msra.mxu0 0.0
    %847 = vmatpush.msra.mxu0 0.0
    %848 = vmatpush.msra.mxu0 0.0
    %849 = vmatpush.msra.mxu0 0.0
    %850 = vmatpush.msra.mxu0 0.0
    %851 = vmatpush.msra.mxu0 0.0
    %852 = vmatpush.msra.mxu0 0.0
    %853 = vmatpush.msra.mxu0 0.0
    %854 = vmatpush.msra.mxu0 0.0
    %855 = vmatpush.msra.mxu0 0.0
    %856 = vmatpush.msra.mxu0 0.0
    %857 = vmatpush.msra.mxu0 %v830
    %858 = vmatpush.msra.mxu0 %v829
    %859 = vmatpush.msra.mxu0 %v828
    %860 = vmatpush.msra.mxu0 %v827
    %861 = vmatmul.f32.gmra.mxu0 %v834
    %v862 = vpop.f32.mrf.mxu0
    %v863 = vadd.f32 %v832, %v862
    %864 = vmatmul.f32.gmra.mxu0 %v837
    %v865 = vpop.f32.mrf.mxu0
    %v866 = vadd.f32 %v832, %v865
    %867 = vmatmul.f32.gmra.mxu0 %v840
    %v868 = vpop.f32.mrf.mxu0
    %v869 = vadd.f32 %v832, %v868
    %870 = vmatmul.f32.gmra.mxu0 %v843
    %v871 = vpop.f32.mrf.mxu0
    %v872 = vadd.f32 %v832, %v871
    %873 = vdwg.mxu0
    %v874 = vmax.f32 %v863, 0.0
    %v875 = vmax.f32 %v866, 0.0
    %v876 = vmax.f32 %v869, 0.0
    %v877 = vmax.f32 %v872, 0.0
    %v878 = vsel %vm195, %v874, 0.0
    %v879 = vsel %vm195, %v875, 0.0
    %v880 = vadd.f32 %v878, %v879
    %v881 = vsel %vm195, %v876, 0.0
    %v882 = vadd.f32 %v880, %v881
    %v883 = vsel %vm195, %v877, 0.0
    %v884 = vadd.f32 %v882, %v883
    %v885 = vrot.slane %v884, 4
    %v886 = vadd.f32 %v884, %v885
    %v887 = vrot.slane %v886, 2
    %v888 = vadd.f32 %v886, %v887
    %v889 = vrot.slane %v888, 1
    %v890 = vadd.f32 %v888, %v889
    %v891 = vmul.f32 %v890, 0.03125
    %v892 = vmul.f32 %v874, %v874
    %v893 = vmul.f32 %v875, %v875
    %v894 = vmul.f32 %v876, %v876
    %v895 = vmul.f32 %v877, %v877
    %v896 = vsel %vm195, %v892, 0.0
    %v897 = vsel %vm195, %v893, 0.0
    %v898 = vadd.f32 %v896, %v897
    %v899 = vsel %vm195, %v894, 0.0
    %v900 = vadd.f32 %v898, %v899
    %v901 = vsel %vm195, %v895, 0.0
    %v902 = vadd.f32 %v900, %v901
    %v903 = vrot.slane %v902, 4
    %v904 = vadd.f32 %v902, %v903
    %v905 = vrot.slane %v904, 2
    %v906 = vadd.f32 %v904, %v905
    %v907 = vrot.slane %v906, 1
    %v908 = vadd.f32 %v906, %v907
    %v909 = vmul.f32 %v908, 0.03125
    %v910 = vmul.f32 %v891, %v891
    %v911 = vsub.f32 %v909, %v910
    %v912 = vld [vmem:[%s9 + $0x2] sm:$0x1]
    %v913 = vadd.f32 %v911, 1e-05
    %v914 = vrsqrt.pop %v913
    %v915 = vmul.f32 %v914, %v913
    %v916 = vmul.f32 %v915, %v914
    %v917 = vmul.f32 0.5, %v916
    %v918 = vsub.f32 1.5, %v917
    %v919 = vmul.f32 %v914, %v918
    %vm920 = vweird.f32 %v913
    %vm921 = vweird.f32 %v914
    %vm922 = vmor %vm920, %vm921
    %v923 = vsel %vm922, %v914, %v919
    %v924 = vmul.f32 %v912, %v923
    %v925 = vld [vmem:[#allocation9 + $0x2] sm:$0x1]
    %v926 = vmul.f32 %v924, %v891
    %v927 = vsub.f32 %v925, %v926
    %v928 = vperm.slane %v924, 0
    %v929 = vmul.f32 %v928, %v874
    %v930 = vmul.f32 %v928, %v875
    %v931 = vmul.f32 %v928, %v876
    %v932 = vmul.f32 %v928, %v877
    %v933 = vperm.slane %v927, 0
    %v934 = vadd.f32 %v929, %v933
    %v935 = vadd.f32 %v930, %v933
    %v936 = vadd.f32 %v931, %v933
    %v937 = vadd.f32 %v932, %v933
    %938 = vmatpush.msra.mxu0 0.0
    %939 = vmatpush.msra.mxu0 0.0
    %940 = vmatpush.msra.mxu0 0.0
    %941 = vmatpush.msra.mxu0 0.0
    %942 = vmatpush.msra.mxu0 0.0
    %943 = vmatpush.msra.mxu0 0.0
    %944 = vmatpush.msra.mxu0 0.0
    %945 = vmatpush.msra.mxu0 0.0
    %946 = vmatpush.msra.mxu0 0.0
    %947 = vmatpush.msra.mxu0 0.0
    %948 = vmatpush.msra.mxu0 0.0
    %949 = vmatpush.msra.mxu0 0.0
    %950 = vmatpush.msra.mxu0 %v937
    %951 = vmatpush.msra.mxu0 %v936
    %952 = vmatpush.msra.mxu0 %v935
    %953 = vmatpush.msra.mxu0 %v934
    %954 = vmatmul.f32.gmra.mxu0 %v197
    %v955 = vpop.f32.mrf.mxu0
    %v956 = vadd.f32 0.0, %v955
    %957 = vmatmul.f32.gmra.mxu0 %v200
    %v958 = vpop.f32.mrf.mxu0
    %v959 = vadd.f32 0.0, %v958
    %960 = vmatmul.f32.gmra.mxu0 %v203
    %v961 = vpop.f32.mrf.mxu0
    %v962 = vadd.f32 0.0, %v961
    %963 = vmatmul.f32.gmra.mxu0 %v206
    %v964 = vpop.f32.mrf.mxu0
    %v965 = vadd.f32 0.0, %v964
    %966 = vdwg.mxu0
    %v967 = vmul.f32 %v388, %v934
    %v968 = vmul.f32 %v388, %v935
    %v969 = vmul.f32 %v388, %v936
    %v970 = vmul.f32 %v388, %v937
    %v971 = vadd.f32 %v967, %v956
    %v972 = vadd.f32 %v968, %v959
    %v973 = vadd.f32 %v969, %v962
    %v974 = vadd.f32 %v970, %v965
    %v976 = vsel %vm195, %v971, 0
    %v979 = vsel %vm195, %v972, 0
    %v982 = vsel %vm195, %v973, 0
    %v985 = vsel %vm195, %v974, 0
    %987 = vmatpush.msra.mxu0 0.0
    %988 = vmatpush.msra.mxu0 0.0
    %989 = vmatpush.msra.mxu0 0.0
    %990 = vmatpush.msra.mxu0 0.0
    %991 = vmatpush.msra.mxu0 0.0
    %992 = vmatpush.msra.mxu0 0.0
    %993 = vmatpush.msra.mxu0 0.0
    %994 = vmatpush.msra.mxu0 0.0
    %995 = vmatpush.msra.mxu0 0.0
    %996 = vmatpush.msra.mxu0 0.0
    %997 = vmatpush.msra.mxu0 0.0
    %998 = vmatpush.msra.mxu0 0.0
    %999 = vmatpush.msra.mxu0 %v171
    %1000 = vmatpush.msra.mxu0 %v170
    %1001 = vmatpush.msra.mxu0 %v169
    %1002 = vmatpush.msra.mxu0 %v168
    %1003 = vmatmul.f32.gmra.mxu0 %v976
    %v1004 = vpop.f32.mrf.mxu0
    %v1005 = vadd.f32 %v398, %v1004
    %1006 = vmatmul.f32.gmra.mxu0 %v979
    %v1007 = vpop.f32.mrf.mxu0
    %v1008 = vadd.f32 %v398, %v1007
    %1009 = vmatmul.f32.gmra.mxu0 %v982
    %v1010 = vpop.f32.mrf.mxu0
    %v1011 = vadd.f32 %v398, %v1010
    %1012 = vmatmul.f32.gmra.mxu0 %v985
    %v1013 = vpop.f32.mrf.mxu0
    %v1014 = vadd.f32 %v398, %v1013
    %1015 = vdwg.mxu0
    %v1016 = vmax.f32 %v1005, 0.0
    %v1017 = vmax.f32 %v1008, 0.0
    %v1018 = vmax.f32 %v1011, 0.0
    %v1019 = vmax.f32 %v1014, 0.0
    %1020 = vmatpush.msra.mxu0 0.0
    %1021 = vmatpush.msra.mxu0 0.0
    %1022 = vmatpush.msra.mxu0 0.0
    %1023 = vmatpush.msra.mxu0 0.0
    %1024 = vmatpush.msra.mxu0 0.0
    %1025 = vmatpush.msra.mxu0 0.0
    %1026 = vmatpush.msra.mxu0 0.0
    %1027 = vmatpush.msra.mxu0 0.0
    %1028 = vmatpush.msra.mxu0 0.0
    %1029 = vmatpush.msra.mxu0 0.0
    %1030 = vmatpush.msra.mxu0 0.0
    %1031 = vmatpush.msra.mxu0 0.0
    %1032 = vmatpush.msra.mxu0 %v1019
    %1033 = vmatpush.msra.mxu0 %v1018
    %1034 = vmatpush.msra.mxu0 %v1017
    %1035 = vmatpush.msra.mxu0 %v1016
    %1036 = vmatmul.f32.gmra.mxu0 %v446
    %v1037 = vpop.f32.mrf.mxu0
    %v1038 = vadd.f32 0.0, %v1037
    %1039 = vdwg.mxu0
    %1040 = vmatpush.msra.mxu0 0.0
    %1041 = vmatpush.msra.mxu0 0.0
    %1042 = vmatpush.msra.mxu0 0.0
    %1043 = vmatpush.msra.mxu0 0.0
    %1044 = vmatpush.msra.mxu0 0.0
    %1045 = vmatpush.msra.mxu0 0.0
    %1046 = vmatpush.msra.mxu0 0.0
    %1047 = vmatpush.msra.mxu0 0.0
    %1048 = vmatpush.msra.mxu0 0.0
    %1049 = vmatpush.msra.mxu0 0.0
    %1050 = vmatpush.msra.mxu0 0.0
    %1051 = vmatpush.msra.mxu0 0.0
    %1052 = vmatpush.msra.mxu0 %v937
    %1053 = vmatpush.msra.mxu0 %v936
    %1054 = vmatpush.msra.mxu0 %v935
    %1055 = vmatpush.msra.mxu0 %v934
    %1056 = vmatmul.f32.gmra.mxu0 %v469
    %v1057 = vpop.f32.mrf.mxu0
    %v1058 = vadd.f32 %v1038, %v1057
    %1059 = vdwg.mxu0
    %v1060 = vadd.s32 %v492, 64
    %v1061 = vadd.s32 %v493, 64
    %v1062 = vadd.s32 %v494, 64
    %v1063 = vadd.s32 %v495, 64
    %vm1064 = vcmp.eq.s32.totalorder %v497, %v1060
    %vm1065 = vcmp.eq.s32.totalorder %v497, %v1061
    %vm1066 = vcmp.eq.s32.totalorder %v497, %v1062
    %vm1067 = vcmp.eq.s32.totalorder %v497, %v1063
    %v1068 = vsel %vm1064, 1, 0
    %v1069 = vsel %vm1065, 1, 0
    %v1070 = vsel %vm1066, 1, 0
    %v1071 = vsel %vm1067, 1, 0
    %v1072 = vcvt.s32.f32 %v1068
    %v1073 = vcvt.s32.f32 %v1069
    %v1074 = vcvt.s32.f32 %v1070
    %v1075 = vcvt.s32.f32 %v1071
    %v1077 = vsel %vm195, %v1058, 0
    %1079 = vmatpush.msra.mxu0 0.0
    %1080 = vmatpush.msra.mxu0 0.0
    %1081 = vmatpush.msra.mxu0 0.0
    %1082 = vmatpush.msra.mxu0 0.0
    %1083 = vmatpush.msra.mxu0 0.0
    %1084 = vmatpush.msra.mxu0 0.0
    %1085 = vmatpush.msra.mxu0 0.0
    %1086 = vmatpush.msra.mxu0 0.0
    %1087 = vmatpush.msra.mxu0 0.0
    %1088 = vmatpush.msra.mxu0 0.0
    %1089 = vmatpush.msra.mxu0 0.0
    %1090 = vmatpush.msra.mxu0 0.0
    %1091 = vmatpush.msra.mxu0 %v1075
    %1092 = vmatpush.msra.mxu0 %v1074
    %1093 = vmatpush.msra.mxu0 %v1073
    %1094 = vmatpush.msra.mxu0 %v1072
    %1095 = vmatmul.f32.gmra.mxu0 %v1077
    %v1096 = vpop.f32.mrf.mxu0
    %v1097 = vadd.f32 0.0, %v1096
    %1098 = vdwg.mxu0
    %v1099 = vadd.f32 %v814, %v1097
    %v1100 = vld [vmem:[#allocation12] sm:$0xff]
    %v1101 = vld [vmem:[#allocation12 + $0x8] sm:$0xff]
    %v1102 = vld [vmem:[#allocation12 + $0x10] sm:$0xff]
    %v1103 = vld [vmem:[#allocation12 + $0x18] sm:$0xff]
    %v1104 = vld [vmem:[#allocation12 + $0x20] sm:$0xff]
    %v1105 = vld [vmem:[#allocation12 + $0x28] sm:$0xff]
    %v1106 = vld [vmem:[#allocation12 + $0x30] sm:$0xff]
    %v1107 = vld [vmem:[#allocation12 + $0x38] sm:$0xff]
    %v1108 = vld [vmem:[#allocation12 + $0x40] sm:$0xff]
    %v1109 = vld [vmem:[#allocation12 + $0x48] sm:$0xff]
    %v1110 = vld [vmem:[#allocation12 + $0x50] sm:$0xff]
    %v1111 = vld [vmem:[#allocation12 + $0x58] sm:$0xff]
    %v1112 = vld [vmem:[%s14] sm:$0x1]
    %v1114 = vperm.slane %v1112, 0
    %vm1116 = vcmask 785408
    %v1118 = vsel %vm1116, %v1099, 0
    %1120 = vmatpush.msra.mxu0 0.0
    %1121 = vmatpush.msra.mxu0 0.0
    %1122 = vmatpush.msra.mxu0 0.0
    %1123 = vmatpush.msra.mxu0 0.0
    %1124 = vmatpush.msra.mxu0 %v1111
    %1125 = vmatpush.msra.mxu0 %v1110
    %1126 = vmatpush.msra.mxu0 %v1109
    %1127 = vmatpush.msra.mxu0 %v1108
    %1128 = vmatpush.msra.mxu0 %v1107
    %1129 = vmatpush.msra.mxu0 %v1106
    %1130 = vmatpush.msra.mxu0 %v1105
    %1131 = vmatpush.msra.mxu0 %v1104
    %1132 = vmatpush.msra.mxu0 %v1103
    %1133 = vmatpush.msra.mxu0 %v1102
    %1134 = vmatpush.msra.mxu0 %v1101
    %1135 = vmatpush.msra.mxu0 %v1100
    %1136 = vmatmul.f32.gmra.mxu0 %v1118
    %v1137 = vpop.f32.mrf.mxu0
    %v1138 = vadd.f32 %v1114, %v1137
    %1139 = vdwg.mxu0
    %v1140 = vmax.f32 %v1138, 0.0
    %v1141 = vld [vmem:[#allocation13] sm:$0xff]
    %v1142 = vld [vmem:[#allocation13 + $0x8] sm:$0xff]
    %v1143 = vld [vmem:[#allocation13 + $0x10] sm:$0xff]
    %v1144 = vld [vmem:[#allocation13 + $0x18] sm:$0xff]
    %v1145 = vld [vmem:[#allocation13 + $0x20] sm:$0xff]
    %v1146 = vld [vmem:[#allocation13 + $0x28] sm:$0xff]
    %v1147 = vld [vmem:[#allocation13 + $0x30] sm:$0xff]
    %v1148 = vld [vmem:[#allocation13 + $0x38] sm:$0xff]
    %v1149 = vld [vmem:[#allocation13 + $0x40] sm:$0xff]
    %v1150 = vld [vmem:[#allocation13 + $0x48] sm:$0xff]
    %v1151 = vld [vmem:[#allocation13 + $0x50] sm:$0xff]
    %v1152 = vld [vmem:[#allocation13 + $0x58] sm:$0xff]
    %v1153 = vld [vmem:[%s16] sm:$0x1]
    %v1155 = vperm.slane %v1153, 0
    %v1158 = vsel %vm1116, %v1140, 0
    %1160 = vmatpush.msra.mxu0 0.0
    %1161 = vmatpush.msra.mxu0 0.0
    %1162 = vmatpush.msra.mxu0 0.0
    %1163 = vmatpush.msra.mxu0 0.0
    %1164 = vmatpush.msra.mxu0 %v1152
    %1165 = vmatpush.msra.mxu0 %v1151
    %1166 = vmatpush.msra.mxu0 %v1150
    %1167 = vmatpush.msra.mxu0 %v1149
    %1168 = vmatpush.msra.mxu0 %v1148
    %1169 = vmatpush.msra.mxu0 %v1147
    %1170 = vmatpush.msra.mxu0 %v1146
    %1171 = vmatpush.msra.mxu0 %v1145
    %1172 = vmatpush.msra.mxu0 %v1144
    %1173 = vmatpush.msra.mxu0 %v1143
    %1174 = vmatpush.msra.mxu0 %v1142
    %1175 = vmatpush.msra.mxu0 %v1141
    %1176 = vmatmul.f32.gmra.mxu0 %v1158
    %v1177 = vpop.f32.mrf.mxu0
    %v1178 = vadd.f32 %v1155, %v1177
    %1179 = vdwg.mxu0
    %v1180 = vmul.f32 %v1178, %v1178
    %v1181 = vsel %vm1116, %v1180, 0.0
    %1182 = vadd.xlane.f32.xlu0 %v1181
    %v1183 = vpop.xlane.xlu0 %1182
    %v1184 = vmax.f32 %v1183, 1e-24
    %v1185 = vrsqrt.pop %v1184
    %v1186 = vmul.f32 %v1185, %v1184
    %v1187 = vmul.f32 %v1186, %v1185
    %v1188 = vmul.f32 0.5, %v1187
    %v1189 = vsub.f32 1.5, %v1188
    %v1190 = vmul.f32 %v1185, %v1189
    %vm1191 = vweird.f32 %v1184
    %vm1192 = vweird.f32 %v1185
    %vm1193 = vmor %vm1191, %vm1192
    %v1194 = vsel %vm1193, %v1185, %v1190
    %v1195 = vmul.f32 %v1178, %v1194
    %v1196 = vadd.s32 %v492, 4
    %vm1197 = vcmp.eq.s32.totalorder %v497, %v1196
    %v1198 = vsel %vm1197, 1, 0
    %v1199 = vcvt.s32.f32 %v1198
    %vm1200 = vcmask 64512
    %v1202 = vsel %vm1200, %v506, 0
    %1204 = vmatpush.msra.mxu0 0.0
    %1205 = vmatpush.msra.mxu0 0.0
    %1206 = vmatpush.msra.mxu0 0.0
    %1207 = vmatpush.msra.mxu0 0.0
    %1208 = vmatpush.msra.mxu0 0.0
    %1209 = vmatpush.msra.mxu0 0.0
    %1210 = vmatpush.msra.mxu0 0.0
    %1211 = vmatpush.msra.mxu0 0.0
    %1212 = vmatpush.msra.mxu0 0.0
    %1213 = vmatpush.msra.mxu0 0.0
    %1214 = vmatpush.msra.mxu0 0.0
    %1215 = vmatpush.msra.mxu0 0.0
    %1216 = vmatpush.msra.mxu0 0.0
    %1217 = vmatpush.msra.mxu0 0.0
    %1218 = vmatpush.msra.mxu0 0.0
    %1219 = vmatpush.msra.mxu0 %v1195
    %1220 = vmatmul.f32.gmra.mxu0 %v1202
    %v1221 = vpop.f32.mrf.mxu0
    %v1222 = vadd.f32 0.0, %v1221
    %1223 = vdwg.mxu0
    %v1225 = vsel %vm1200, %v1199, 0
    %1227 = vmatpush.msra.mxu0 0.0
    %1228 = vmatpush.msra.mxu0 0.0
    %1229 = vmatpush.msra.mxu0 0.0
    %1230 = vmatpush.msra.mxu0 0.0
    %1231 = vmatpush.msra.mxu0 0.0
    %1232 = vmatpush.msra.mxu0 0.0
    %1233 = vmatpush.msra.mxu0 0.0
    %1234 = vmatpush.msra.mxu0 0.0
    %1235 = vmatpush.msra.mxu0 0.0
    %1236 = vmatpush.msra.mxu0 0.0
    %1237 = vmatpush.msra.mxu0 0.0
    %1238 = vmatpush.msra.mxu0 0.0
    %1239 = vmatpush.msra.mxu0 0.0
    %1240 = vmatpush.msra.mxu0 0.0
    %1241 = vmatpush.msra.mxu0 0.0
    %1242 = vmatpush.msra.mxu0 %v1195
    %1243 = vmatmul.f32.gmra.mxu0 %v1225
    %v1244 = vpop.f32.mrf.mxu0
    %v1245 = vadd.f32 0.0, %v1244
    %1246 = vdwg.mxu0
    %v1248 = vsel %vm1116, %v1222, 0
    %v1251 = vsel %vm1116, %v1245, 0
    %1253 = vmatpush.xpose.msra.mxu0 0.0
    %1254 = vmatpush.xpose.msra.mxu0 0.0
    %1255 = vmatpush.xpose.msra.mxu0 0.0
    %1256 = vmatpush.xpose.msra.mxu0 0.0
    %1257 = vmatpush.xpose.msra.mxu0 0.0
    %1258 = vmatpush.xpose.msra.mxu0 0.0
    %1259 = vmatpush.xpose.msra.mxu0 0.0
    %1260 = vmatpush.xpose.msra.mxu0 0.0
    %1261 = vmatpush.xpose.msra.mxu0 0.0
    %1262 = vmatpush.xpose.msra.mxu0 0.0
    %1263 = vmatpush.xpose.msra.mxu0 0.0
    %1264 = vmatpush.xpose.msra.mxu0 0.0
    %1265 = vmatpush.xpose.msra.mxu0 0.0
    %1266 = vmatpush.xpose.msra.mxu0 0.0
    %1267 = vmatpush.xpose.msra.mxu0 0.0
    %1268 = vmatpush.xpose.msra.mxu0 %v1251
    %1269 = vmatmul.f32.gmra.mxu0 %v1248
    %v1270 = vpop.f32.mrf.mxu0
    %v1271 = vadd.f32 0.0, %v1270
    %1272 = vdwg.mxu0
    %v1273 = vstv %s190
    %v1274 = vmul.f32 %v1271, %v1273
    %v1275 = vmul.f32 %v1274, 1.442695
    %v1276 = vpow.pop %v1275
    %vm1277 = vcmp.eq.s32.totalorder %v492, %v497
    %v1278 = vsel %vm1277, %v1276, 0.0
    %vm1279 = vcmask 27648
    %v1280 = vsel %vm1279, %v1278, 0.0
    %1281 = vadd.xlane.f32.xlu0 %v1280
    %v1282 = vpop.xlane.xlu0 %1281
    %v1283 = vrot.slane %v1280, 4
    %v1284 = vadd.f32 %v1280, %v1283
    %v1285 = vrot.slane %v1284, 2
    %v1286 = vadd.f32 %v1284, %v1285
    %v1287 = vrot.slane %v1286, 1
    %v1288 = vadd.f32 %v1286, %v1287
    %v1289 = vsel %vm1279, %v1276, 0.0
    %1290 = vadd.xlane.f32.xlu0 %v1289
    %v1291 = vpop.xlane.xlu0 %1290
    %v1292 = vrot.slane %v1289, 4
    %v1293 = vadd.f32 %v1289, %v1292
    %v1294 = vrot.slane %v1293, 2
    %v1295 = vadd.f32 %v1293, %v1294
    %v1296 = vrot.slane %v1295, 1
    %v1297 = vadd.f32 %v1295, %v1296
    %v1298 = vlog2.pop %v1282
    %v1299 = vmul.f32 %v1298, 0.6931472
    %v1300 = vsub.f32 %v1291, %v1282
    %v1301 = vlog2.pop %v1300
    %v1302 = vmul.f32 %v1301, 0.6931472
    %v1303 = vsub.f32 %v1299, %v1302
    %vm1304 = vcmask 3072
    %v1305 = vsel %vm1304, %v1303, 0.0
    %1306 = vadd.xlane.f32.xlu0 %v1305
    %v1307 = vpop.xlane.xlu0 %1306
    %v1308 = vrot.slane %v1307, 4
    %v1309 = vadd.f32 %v1307, %v1308
    %v1310 = vrot.slane %v1309, 2
    %v1311 = vadd.f32 %v1309, %v1310
    %v1312 = vrot.slane %v1311, 1
    %v1313 = vadd.f32 %v1311, %v1312
    %s1314 = vtos %v1313
    %s1315 = ssub.f32 0.0, %s1314
    %v1316 = vrcp.pop 4.0
    %v1317 = vmul.f32 4.0, %v1316
    %v1318 = vsub.f32 1.0, %v1317
    %v1319 = vmul.f32 %v1316, %v1318
    %v1320 = vadd.f32 %v1316, %v1319
    %vm1321 = vweird.f32 %v1316
    %v1322 = vsel %vm1321, %v1316, %v1320
    %s1323 = vtos %v1322
    %s1324 = smul.f32 %s1315, %s1323
    %v1325 = vlog2.pop %v1288
    %v1326 = vmul.f32 %v1325, 0.6931472
    %v1327 = vsub.f32 %v1297, %v1288
    %v1328 = vlog2.pop %v1327
    %v1329 = vmul.f32 %v1328, 0.6931472
    %v1330 = vsub.f32 %v1326, %v1329
    %vm1331 = vcmask 24576
    %v1332 = vsel %vm1331, %v1330, 0.0
    %1333 = vadd.xlane.f32.xlu0 %v1332
    %v1334 = vpop.xlane.xlu0 %1333
    %v1335 = vrot.slane %v1334, 4
    %v1336 = vadd.f32 %v1334, %v1335
    %v1337 = vrot.slane %v1336, 2
    %v1338 = vadd.f32 %v1336, %v1337
    %v1339 = vrot.slane %v1338, 1
    %v1340 = vadd.f32 %v1338, %v1339
    %s1341 = vtos %v1340
    %s1342 = ssub.f32 0.0, %s1341
    %v1343 = vrcp.pop 4.0
    %v1344 = vmul.f32 4.0, %v1343
    %v1345 = vsub.f32 1.0, %v1344
    %v1346 = vmul.f32 %v1343, %v1345
    %v1347 = vadd.f32 %v1343, %v1346
    %vm1348 = vweird.f32 %v1343
    %v1349 = vsel %vm1348, %v1343, %v1347
    %s1350 = vtos %v1349
    %s1351 = smul.f32 %s1342, %s1350
    %s1352 = sadd.f32 %s1324, %s1351
    %s1353 = smul.f32 %s1352, 0.5
    %s1354 = scalar_lea.smem [#allocation15], 0
    %1355 = sst [smem:[%s1354]] %s1353
    // Predicated region
    $region98: #{forward.1} parent=1 // pred_check
      _
    $region99: #{forward.1} parent=1 // pred_check_branch
      %1357 = sbr.rel (0) target = $region101
    $region100: #{forward.1} parent=1 // pred_region
      %1359 = vsyncadd [#allocation4], 0
      %s1361 = sshll.u32 %s17, 4
      %s1362 = int_to_ptr.hbm [resolvable:$true] %s1361
      %1364 = dma.smem_to_hbm [#allocation15], 16, %s1362, [#allocation4]
    $region101: #{forward.1} parent=1 // pred_fallthru
      _
    // Predicated region
    $region102: #{forward.1} parent=1 // pred_check
      _
    $region103: #{forward.1} parent=1 // pred_check_branch
      %1366 = sbr.rel (0) target = $region105
    $region104: #{forward.1} parent=1 // pred_region
      %1368 = dma.done [#allocation4], 16
    $region105: #{forward.1} parent=1 // pred_fallthru
      _
    %1369 = sfence
    %1370 = vsyncpa [#allocation3], 1
    %1371 = vsyncpa [#allocation8], 1
    %1372 = vsyncpa [#allocation11], 1
    %1373 = vsyncpa [#allocation14], 1
    %1374 = vsyncpa [#allocation4], 1
    %1375 = vsyncpa [#allocation5], 1

</llo_original>
